<compile_context>
chip_gen: v6e
topology: v6e:2x2x1
jax: 0.10.0
libtpu: 0.0.40
codegen_flags: <defaults>
</compile_context>

<pallas_src>
import jax
import jax.numpy as jnp
from jax.experimental import pallas as pl
from jax.experimental.pallas import tpu as pltpu

VMEM = pltpu.MemorySpace.VMEM
SMEM = pltpu.MemorySpace.SMEM

# bf16 MXU operands on real TPU hardware; f32 fallback on CPU/interpret (the CPU dot
# thunk lacks BF16 x BF16 = F32).
_ON_TPU = jax.default_backend() == "tpu"
_MXU_DTYPE = jnp.bfloat16 if _ON_TPU else jnp.float32


def _recip(x):
    # Approx reciprocal lowers to the EUP slot on TPU (nearly free); plain divide
    # elsewhere so interpret mode needs no Mosaic-only primitive.
    return pl.reciprocal(x, approx=True) if _ON_TPU else 1.0 / x


def _layernorm(h, gamma, beta, eps=1e-5):
    mu = jnp.mean(h, axis=-1, keepdims=True)
    var = jnp.mean((h - mu) ** 2, axis=-1, keepdims=True)
    return (h - mu) * jax.lax.rsqrt(var + eps) * gamma + beta


# ------------------------------ fused kernel -------------------------------

def _gen_kernel(t_ref, x_ref, er_ref, src_ref, dst_ref,
                nw_ref, nb_ref, ew_ref, eb_ref,
                pg_ref, pb_ref,
                w1_ref, b1_ref, lg_ref, lb_ref, w2_ref, b2_ref,
                hg_ref, hb_ref, lw_ref, lbias_ref,
                o_ref,
                h_scr, ea_scr):
    f32 = jnp.float32
    cdt = w1_ref.dtype                       # MXU operand dtype (bf16 on TPU, f32 on CPU)
    li = pl.program_id(0)
    last = pl.num_programs(0) - 1
    n_nodes, hidden = h_scr.shape
    n_edges = ea_scr.shape[0]

    # ---- grid step 0: node / edge encoders; results stay resident in VMEM scratch ----
    @pl.when(li == 0)
    def _():
        h_scr[...] = (jnp.dot(x_ref[...].astype(cdt), nw_ref[...],
                              preferred_element_type=f32) + nb_ref[...])
        ea_scr[...] = (jnp.dot(er_ref[...].astype(cdt), ew_ref[...],
                               preferred_element_type=f32) + eb_ref[...])

    # One-hot gather/scatter masks rebuilt in-register from the int32 index vectors
    # (cheap VPU compares, no O(E*N) HBM traffic).
    # TODO(synk): at real ogbn-proteins scale replace the dense one-hot MXU
    # gather/scatter with scalar-prefetch index gather + a dst-sorted segment sum
    # over edge tiles (also enables a node-tile "parallel" axis for v7x's 2 TCs).
    gsrc = (jax.lax.broadcasted_iota(jnp.int32, (n_edges, n_nodes), 1)
            == src_ref[...]).astype(cdt)                      # (E, N): gather x[src]
    sdst = (jax.lax.broadcasted_iota(jnp.int32, (n_nodes, n_edges), 0)
            == dst_ref[...]).astype(cdt)                      # (N, E): scatter to dst

    h = h_scr[...]
    # 'res+' pre-norm for layers >= 1; layer 0 convolves the raw encoded features.
    prenorm = jnp.maximum(_layernorm(h, pg_ref[...], pb_ref[...]), 0.0)
    is_l0 = (li == 0).astype(f32)
    h_in = is_l0 * h + (1.0 - is_l0) * prenorm

    # -- GENConv(aggr='softmax', learn_t, eps=1e-7, MLP num_layers=2, norm='layer') --
    t = t_ref[li]                                             # SMEM scalar temperature
    x_j = jnp.dot(gsrc, h_in.astype(cdt), preferred_element_type=f32)   # (E, H)
    msg = jnp.maximum(x_j + ea_scr[...], 0.0) + 1e-7
    # Shift exp() by the global per-channel max of msg (softmax shift-invariant for
    # t > 0); max taken before the temperature multiply so the XLU reduce overlaps the
    # VALU scale.  PyG shifts per destination -- see TODO above.
    m = jnp.max(msg, axis=0, keepdims=True)
    wgt = jnp.exp(t * (msg - m))                                        # (E, H)
    num = jnp.dot(sdst, (wgt * msg).astype(cdt), preferred_element_type=f32)  # (N, H)
    den = jnp.dot(sdst, wgt.astype(cdt), preferred_element_type=f32)
    out = num * _recip(den + 1e-16) + h_in                    # aggregation + x_r
    # MLP: Linear(H->2H) -> LayerNorm(2H) -> ReLU -> Linear(2H->H)
    h1 = jnp.dot(out.astype(cdt), w1_ref[...], preferred_element_type=f32) + b1_ref[...]
    h1 = jnp.maximum(_layernorm(h1, lg_ref[...], lb_ref[...]), 0.0)
    conv = jnp.dot(h1.astype(cdt), w2_ref[...], preferred_element_type=f32) + b2_ref[...]

    # Layer 0: h = conv.  Layers >= 1: 'res+' residual h = h + conv.
    # TODO(synk): DeepGCNLayer dropout(p=0.1) is identity in eval mode.
    h_new = conv + (1.0 - is_l0) * h
    h_scr[...] = h_new

    # ---- final grid step: head = relu(LayerNorm_0(x)) -> Linear (lane-padded) ----
    @pl.when(li == last)
    def _():
        hh = jnp.maximum(_layernorm(h_new, hg_ref[...], hb_ref[...]), 0.0)
        o_ref[...] = (jnp.dot(hh.astype(cdt), lw_ref[...],
                              preferred_element_type=f32) + lbias_ref[...])


# --------------------------- parameter creation ----------------------------

def init_params(key, node_feat, edge_feat, hidden, out_dim, num_layers):
    def dense(k, din, dout):
        k1, k2 = jax.random.split(k)
        w = jax.random.normal(k1, (din, dout), jnp.float32) / jnp.sqrt(float(din))
        b = jax.random.normal(k2, (dout,), jnp.float32) * 0.01
        return w, b

    keys = jax.random.split(key, 3 + num_layers)
    p = {}
    p['node_w'], nb = dense(keys[0], node_feat, hidden)
    p['node_b'] = nb.reshape(1, -1)
    p['edge_w'], eb = dense(keys[1], edge_feat, hidden)
    p['edge_b'] = eb.reshape(1, -1)
    p['lin_w'], lb = dense(keys[2], hidden, out_dim)
    p['lin_b'] = lb.reshape(1, -1)

    w1s, b1s, w2s, b2s = [], [], [], []
    for i in range(num_layers):
        k = jax.random.split(keys[3 + i], 2)
        w1, b1 = dense(k[0], hidden, 2 * hidden)
        w2, b2 = dense(k[1], 2 * hidden, hidden)
        w1s.append(w1); b1s.append(b1.reshape(1, -1))
        w2s.append(w2); b2s.append(b2.reshape(1, -1))

    L = num_layers
    p['t'] = jnp.ones((L,), jnp.float32)                        # learn_t init 1.0
    p['pre_gamma'] = jnp.ones((L, 1, hidden), jnp.float32)      # DeepGCNLayer LN
    p['pre_beta'] = jnp.zeros((L, 1, hidden), jnp.float32)
    p['w1'] = jnp.stack(w1s); p['b1'] = jnp.stack(b1s)
    p['ln_gamma'] = jnp.ones((L, 1, 2 * hidden), jnp.float32)   # GENConv MLP LN
    p['ln_beta'] = jnp.zeros((L, 1, 2 * hidden), jnp.float32)
    p['w2'] = jnp.stack(w2s); p['b2'] = jnp.stack(b2s)
    return p


# ------------------------------ full forward -------------------------------

def gen_forward(params, x, edge_index, edge_attr):
    n = x.shape[0]
    e = edge_attr.shape[0]
    num_layers, hidden = params['w1'].shape[0], params['w1'].shape[1]
    out_dim = params['lin_w'].shape[1]
    out_pad = ((out_dim + 127) // 128) * 128           # lane-dense output store

    cdt = _MXU_DTYPE
    src = edge_index[0].astype(jnp.int32).reshape(e, 1)
    dst = edge_index[1].astype(jnp.int32).reshape(1, e)

    lin_w = jnp.zeros((hidden, out_pad), cdt).at[:, :out_dim].set(
        params['lin_w'].astype(cdt))
    lin_b = jnp.zeros((1, out_pad), jnp.float32).at[:, :out_dim].set(params['lin_b'])

    args = (params['t'], x, edge_attr, src, dst,
            params['node_w'].astype(cdt), params['node_b'],
            params['edge_w'].astype(cdt), params['edge_b'],
            params['pre_gamma'], params['pre_beta'],
            params['w1'].astype(cdt), params['b1'],
            params['ln_gamma'], params['ln_beta'],
            params['w2'].astype(cdt), params['b2'],
            params['pre_gamma'][0], params['pre_beta'][0],   # head norm = layers[0].norm
            lin_w, lin_b)

    full = pl.BlockSpec(memory_space=VMEM)

    def stacked(*tail):  # one layer's slice per grid step, double-buffered by Pallas
        nzero = len(tail)
        return pl.BlockSpec((None, *tail), lambda l: (l,) + (0,) * nzero)

    in_specs = [pl.BlockSpec(memory_space=SMEM),          # t (per-layer temperature)
                full, full, full, full,                    # x, edge_attr, src, dst
                full, full, full, full,                    # node_w/b, edge_w/b
                stacked(1, hidden), stacked(1, hidden),    # pre-norm gamma/beta
                stacked(hidden, 2 * hidden), stacked(1, 2 * hidden),   # w1, b1
                stacked(1, 2 * hidden), stacked(1, 2 * hidden),        # MLP LN gamma/beta
                stacked(2 * hidden, hidden), stacked(1, hidden),       # w2, b2
                full, full,                                # head norm gamma/beta
                full, full]                                # lin_w, lin_b

    # Advisory cost estimate (dense one-hot gather/scatter + MLP matmuls).
    flops_layer = 3 * 2 * e * n * hidden + 2 * 2 * n * hidden * (2 * hidden)
    flops = (num_layers * flops_layer + 2 * n * x.shape[1] * hidden
             + 2 * e * edge_attr.shape[1] * hidden + 2 * n * hidden * out_pad)
    transcendentals = num_layers * (e * hidden + 3 * n) + n
    bytes_accessed = int(sum(a.size * a.dtype.itemsize for a in args)) + n * out_pad * 4

    out_full = pl.pallas_call(
        _gen_kernel,
        out_shape=jax.ShapeDtypeStruct((n, out_pad), jnp.float32),
        grid=(num_layers,),
        in_specs=in_specs,
        out_specs=pl.BlockSpec((n, out_pad), lambda l: (0, 0)),
        scratch_shapes=[pltpu.VMEM((n, hidden), jnp.float32),    # node-feature carry
                        pltpu.VMEM((e, hidden), jnp.float32)],   # encoded edge features
        compiler_params=pltpu.CompilerParams(
            dimension_semantics=("arbitrary",),                  # layer axis is sequential
            vmem_limit_bytes=32 * 1024 * 1024),
        cost_estimate=pl.CostEstimate(flops=flops, transcendentals=transcendentals,
                                      bytes_accessed=bytes_accessed),
    )(*args)
    return out_full[:, :out_dim]


if __name__ == "__main__":
    key = jax.random.PRNGKey(0)
    N, E = 16, 48
    NODE_F, EDGE_F, HIDDEN, OUT_DIM, NUM_LAYERS = 8, 8, 32, 16, 3

    k1, k2, k3, k4, kp = jax.random.split(key, 5)
    x = jax.random.normal(k1, (N, NODE_F), jnp.float32)
    edge_attr = jax.random.normal(k2, (E, EDGE_F), jnp.float32)
    src = jax.random.randint(k3, (E,), 0, N)
    dst = jax.random.randint(k4, (E,), 0, N)
    edge_index = jnp.stack([src, dst], axis=0)

    params = init_params(kp, NODE_F, EDGE_F, HIDDEN, OUT_DIM, NUM_LAYERS)

    out = jax.jit(gen_forward)(params, x, edge_index, edge_attr)
    jax.block_until_ready(out)
    assert out.shape == (N, OUT_DIM) and out.dtype == jnp.float32
    print("KERNEL_OK")
</pallas_src>

<mosaic_0001>
module attributes {stable_mosaic.version = 11 : i64} {
  func.func @_gen_kernel(%arg0: i32, %arg1: memref<3xf32, #tpu.memory_space<smem>>, %arg2: memref<16x8xf32, #tpu.memory_space<vmem>>, %arg3: memref<48x8xf32, #tpu.memory_space<vmem>>, %arg4: memref<48x1xi32, #tpu.memory_space<vmem>>, %arg5: memref<1x48xi32, #tpu.memory_space<vmem>>, %arg6: memref<8x32xf32, #tpu.memory_space<vmem>>, %arg7: memref<1x32xf32, #tpu.memory_space<vmem>>, %arg8: memref<8x32xf32, #tpu.memory_space<vmem>>, %arg9: memref<1x32xf32, #tpu.memory_space<vmem>>, %arg10: memref<1x1x32xf32, #tpu.memory_space<vmem>>, %arg11: memref<1x1x32xf32, #tpu.memory_space<vmem>>, %arg12: memref<1x32x64xf32, #tpu.memory_space<vmem>>, %arg13: memref<1x1x64xf32, #tpu.memory_space<vmem>>, %arg14: memref<1x1x64xf32, #tpu.memory_space<vmem>>, %arg15: memref<1x1x64xf32, #tpu.memory_space<vmem>>, %arg16: memref<1x64x32xf32, #tpu.memory_space<vmem>>, %arg17: memref<1x1x32xf32, #tpu.memory_space<vmem>>, %arg18: memref<1x32xf32, #tpu.memory_space<vmem>>, %arg19: memref<1x32xf32, #tpu.memory_space<vmem>>, %arg20: memref<32x128xf32, #tpu.memory_space<vmem>>, %arg21: memref<1x128xf32, #tpu.memory_space<vmem>>, %arg22: memref<16x128xf32, #tpu.memory_space<vmem>>, %arg23: memref<16x32xf32, #tpu.memory_space<vmem>>, %arg24: memref<48x32xf32, #tpu.memory_space<vmem>>) attributes {dimension_semantics = [#tpu.dimension_semantics<arbitrary>], iteration_bounds = array<i64: 3>, scalar_prefetch = 0 : i64, scratch_operands = 2 : i64, tpu.core_type = #tpu.core_type<tc>, window_params = [{transform_indices = @transform_0, window_bounds = array<i64: 3>}, {pipeline_mode = #tpu.pipeline_mode<synchronous>, transform_indices = @transform_1, window_bounds = array<i64: 16, 8>}, {pipeline_mode = #tpu.pipeline_mode<synchronous>, transform_indices = @transform_2, window_bounds = array<i64: 48, 8>}, {pipeline_mode = #tpu.pipeline_mode<synchronous>, transform_indices = @transform_3, window_bounds = array<i64: 48, 1>}, {pipeline_mode = #tpu.pipeline_mode<synchronous>, transform_indices = @transform_4, window_bounds = array<i64: 1, 48>}, {pipeline_mode = #tpu.pipeline_mode<synchronous>, transform_indices = @transform_5, window_bounds = array<i64: 8, 32>}, {pipeline_mode = #tpu.pipeline_mode<synchronous>, transform_indices = @transform_6, window_bounds = array<i64: 1, 32>}, {pipeline_mode = #tpu.pipeline_mode<synchronous>, transform_indices = @transform_7, window_bounds = array<i64: 8, 32>}, {pipeline_mode = #tpu.pipeline_mode<synchronous>, transform_indices = @transform_8, window_bounds = array<i64: 1, 32>}, {transform_indices = @transform_9, window_bounds = array<i64: 1, 1, 32>}, {transform_indices = @transform_10, window_bounds = array<i64: 1, 1, 32>}, {transform_indices = @transform_11, window_bounds = array<i64: 1, 32, 64>}, {transform_indices = @transform_12, window_bounds = array<i64: 1, 1, 64>}, {transform_indices = @transform_13, window_bounds = array<i64: 1, 1, 64>}, {transform_indices = @transform_14, window_bounds = array<i64: 1, 1, 64>}, {transform_indices = @transform_15, window_bounds = array<i64: 1, 64, 32>}, {transform_indices = @transform_16, window_bounds = array<i64: 1, 1, 32>}, {pipeline_mode = #tpu.pipeline_mode<synchronous>, transform_indices = @transform_17, window_bounds = array<i64: 1, 32>}, {pipeline_mode = #tpu.pipeline_mode<synchronous>, transform_indices = @transform_18, window_bounds = array<i64: 1, 32>}, {pipeline_mode = #tpu.pipeline_mode<synchronous>, transform_indices = @transform_19, window_bounds = array<i64: 32, 128>}, {pipeline_mode = #tpu.pipeline_mode<synchronous>, transform_indices = @transform_20, window_bounds = array<i64: 1, 128>}, {pipeline_mode = #tpu.pipeline_mode<synchronous>, transform_indices = @transform_21, window_bounds = array<i64: 16, 128>}]} {
    %c0_i32 = arith.constant 0 : i32
    %0 = arith.cmpi eq, %arg0, %c0_i32 : i32
    %1 = arith.extui %0 : i1 to i32
    %c0_i32_0 = arith.constant 0 : i32
    %2 = arith.cmpi ne, %1, %c0_i32_0 : i32
    scf.if %2 {
      %c0_59 = arith.constant 0 : index
      %c0_60 = arith.constant 0 : index
      %128 = vector.load %arg2[%c0_59, %c0_60] : memref<16x8xf32, #tpu.memory_space<vmem>>, vector<16x8xf32>
      %c0_61 = arith.constant 0 : index
      %c0_62 = arith.constant 0 : index
      %129 = vector.load %arg6[%c0_61, %c0_62] : memref<8x32xf32, #tpu.memory_space<vmem>>, vector<8x32xf32>
      %cst_63 = arith.constant dense<0.000000e+00> : vector<16x32xf32>
      %130 = tpu.matmul %128, %129, %cst_63 {dimension_numbers = #tpu.dot_dimension_numbers<[1], [0], [0], [1], [0, 0, 1, 1], [], []>} : vector<16x8xf32>, vector<8x32xf32>, vector<16x32xf32> -> vector<16x32xf32>
      %c0_64 = arith.constant 0 : index
      %c0_65 = arith.constant 0 : index
      %131 = vector.load %arg7[%c0_64, %c0_65] : memref<1x32xf32, #tpu.memory_space<vmem>>, vector<1x32xf32>
      %132 = vector.broadcast %131 : vector<1x32xf32> to vector<16x32xf32>
      %133 = arith.addf %130, %132 : vector<16x32xf32>
      %c0_66 = arith.constant 0 : index
      %c0_67 = arith.constant 0 : index
      %134 = vector.load %arg23[%c0_66, %c0_67] : memref<16x32xf32, #tpu.memory_space<vmem>>, vector<16x32xf32>
      tpu.vector_store %arg23[%c0_66, %c0_67], %133 {strides = array<i32>} : memref<16x32xf32, #tpu.memory_space<vmem>>, vector<16x32xf32>,
      %c0_68 = arith.constant 0 : index
      %c0_69 = arith.constant 0 : index
      %135 = vector.load %arg3[%c0_68, %c0_69] : memref<48x8xf32, #tpu.memory_space<vmem>>, vector<48x8xf32>
      %c0_70 = arith.constant 0 : index
      %c0_71 = arith.constant 0 : index
      %136 = vector.load %arg8[%c0_70, %c0_71] : memref<8x32xf32, #tpu.memory_space<vmem>>, vector<8x32xf32>
      %cst_72 = arith.constant dense<0.000000e+00> : vector<48x32xf32>
      %137 = tpu.matmul %135, %136, %cst_72 {dimension_numbers = #tpu.dot_dimension_numbers<[1], [0], [0], [1], [0, 0, 1, 1], [], []>} : vector<48x8xf32>, vector<8x32xf32>, vector<48x32xf32> -> vector<48x32xf32>
      %c0_73 = arith.constant 0 : index
      %c0_74 = arith.constant 0 : index
      %138 = vector.load %arg9[%c0_73, %c0_74] : memref<1x32xf32, #tpu.memory_space<vmem>>, vector<1x32xf32>
      %139 = vector.broadcast %138 : vector<1x32xf32> to vector<48x32xf32>
      %140 = arith.addf %137, %139 : vector<48x32xf32>
      %c0_75 = arith.constant 0 : index
      %c0_76 = arith.constant 0 : index
      %141 = vector.load %arg24[%c0_75, %c0_76] : memref<48x32xf32, #tpu.memory_space<vmem>>, vector<48x32xf32>
      tpu.vector_store %arg24[%c0_75, %c0_76], %140 {strides = array<i32>} : memref<48x32xf32, #tpu.memory_space<vmem>>, vector<48x32xf32>,
    } else {
    }
    %3 = tpu.iota {dimensions = array<i32: 1>} : vector<48x16xi32>
    %c0 = arith.constant 0 : index
    %c0_1 = arith.constant 0 : index
    %4 = vector.load %arg4[%c0, %c0_1] : memref<48x1xi32, #tpu.memory_space<vmem>>, vector<48x1xi32>
    %5 = vector.broadcast %4 : vector<48x1xi32> to vector<48x16xi32>
    %6 = arith.cmpi eq, %3, %5 : vector<48x16xi32>
    %7 = arith.extui %6 : vector<48x16xi1> to vector<48x16xi32>
    %8 = arith.sitofp %7 : vector<48x16xi32> to vector<48x16xf32>
    %9 = tpu.iota {dimensions = array<i32: 0>} : vector<16x48xi32>
    %c0_2 = arith.constant 0 : index
    %c0_3 = arith.constant 0 : index
    %10 = vector.load %arg5[%c0_2, %c0_3] : memref<1x48xi32, #tpu.memory_space<vmem>>, vector<1x48xi32>
    %11 = vector.broadcast %10 : vector<1x48xi32> to vector<16x48xi32>
    %12 = arith.cmpi eq, %9, %11 : vector<16x48xi32>
    %13 = arith.extui %12 : vector<16x48xi1> to vector<16x48xi32>
    %14 = arith.sitofp %13 : vector<16x48xi32> to vector<16x48xf32>
    %c0_4 = arith.constant 0 : index
    %c0_5 = arith.constant 0 : index
    %15 = vector.load %arg23[%c0_4, %c0_5] : memref<16x32xf32, #tpu.memory_space<vmem>>, vector<16x32xf32>
    %c0_6 = arith.constant 0 : index
    %c0_7 = arith.constant 0 : index
    %c0_8 = arith.constant 0 : index
    %16 = vector.load %arg10[%c0_6, %c0_7, %c0_8] : memref<1x1x32xf32, #tpu.memory_space<vmem>>, vector<1x1x32xf32>
    %17 = vector.shape_cast %16 : vector<1x1x32xf32> to vector<1x32xf32>
    %c0_9 = arith.constant 0 : index
    %c0_10 = arith.constant 0 : index
    %c0_11 = arith.constant 0 : index
    %18 = vector.load %arg11[%c0_9, %c0_10, %c0_11] : memref<1x1x32xf32, #tpu.memory_space<vmem>>, vector<1x1x32xf32>
    %19 = vector.shape_cast %18 : vector<1x1x32xf32> to vector<1x32xf32>
    %cst = arith.constant dense<0.000000e+00> : vector<16xf32>
    %20 = vector.multi_reduction <add>, %15, %cst [1] : vector<16x32xf32> to vector<16xf32>
    %21 = vector.shape_cast %20 : vector<16xf32> to vector<16x1xf32>
    %cst_12 = arith.constant 3.200000e+01 : f32
    %22 = vector.broadcast %cst_12 : f32 to vector<16x1xf32>
    %23 = arith.divf %21, %22 : vector<16x1xf32>
    %24 = vector.broadcast %23 : vector<16x1xf32> to vector<16x32xf32>
    %25 = arith.subf %15, %24 : vector<16x32xf32>
    %26 = arith.mulf %25, %25 : vector<16x32xf32>
    %cst_13 = arith.constant dense<0.000000e+00> : vector<16xf32>
    %27 = vector.multi_reduction <add>, %26, %cst_13 [1] : vector<16x32xf32> to vector<16xf32>
    %28 = vector.shape_cast %27 : vector<16xf32> to vector<16x1xf32>
    %cst_14 = arith.constant 3.200000e+01 : f32
    %29 = vector.broadcast %cst_14 : f32 to vector<16x1xf32>
    %30 = arith.divf %28, %29 : vector<16x1xf32>
    %31 = vector.broadcast %23 : vector<16x1xf32> to vector<16x32xf32>
    %32 = arith.subf %15, %31 : vector<16x32xf32>
    %cst_15 = arith.constant 9.99999974E-6 : f32
    %33 = vector.broadcast %cst_15 : f32 to vector<16x1xf32>
    %34 = arith.addf %30, %33 : vector<16x1xf32>
    %35 = math.rsqrt %34 : vector<16x1xf32>
    %36 = vector.broadcast %35 : vector<16x1xf32> to vector<16x32xf32>
    %37 = arith.mulf %32, %36 : vector<16x32xf32>
    %38 = vector.broadcast %17 : vector<1x32xf32> to vector<16x32xf32>
    %39 = arith.mulf %37, %38 : vector<16x32xf32>
    %40 = vector.broadcast %19 : vector<1x32xf32> to vector<16x32xf32>
    %41 = arith.addf %39, %40 : vector<16x32xf32>
    %cst_16 = arith.constant 0.000000e+00 : f32
    %42 = vector.broadcast %cst_16 : f32 to vector<16x32xf32>
    %43 = arith.maximumf %41, %42 : vector<16x32xf32>
    %c0_i32_17 = arith.constant 0 : i32
    %44 = arith.cmpi eq, %arg0, %c0_i32_17 : i32
    %45 = arith.extui %44 : i1 to i32
    %46 = arith.sitofp %45 : i32 to f32
    %47 = vector.broadcast %46 : f32 to vector<16x32xf32>
    %48 = arith.mulf %47, %15 : vector<16x32xf32>
    %cst_18 = arith.constant 1.000000e+00 : f32
    %49 = arith.subf %cst_18, %46 : f32
    %50 = vector.broadcast %49 : f32 to vector<16x32xf32>
    %51 = arith.mulf %50, %43 : vector<16x32xf32>
    %52 = arith.addf %48, %51 : vector<16x32xf32>
    %53 = arith.index_cast %arg0 : i32 to index
    %54 = memref.load %arg1[%53] : memref<3xf32, #tpu.memory_space<smem>>
    %cst_19 = arith.constant dense<0.000000e+00> : vector<48x32xf32>
    %55 = tpu.matmul %8, %52, %cst_19 {dimension_numbers = #tpu.dot_dimension_numbers<[1], [0], [0], [1], [0, 0, 1, 1], [], []>} : vector<48x16xf32>, vector<16x32xf32>, vector<48x32xf32> -> vector<48x32xf32>
    %c0_20 = arith.constant 0 : index
    %c0_21 = arith.constant 0 : index
    %56 = vector.load %arg24[%c0_20, %c0_21] : memref<48x32xf32, #tpu.memory_space<vmem>>, vector<48x32xf32>
    %57 = arith.addf %55, %56 : vector<48x32xf32>
    %cst_22 = arith.constant 0.000000e+00 : f32
    %58 = vector.broadcast %cst_22 : f32 to vector<48x32xf32>
    %59 = arith.maximumf %57, %58 : vector<48x32xf32>
    %cst_23 = arith.constant 1.000000e-07 : f32
    %60 = vector.broadcast %cst_23 : f32 to vector<48x32xf32>
    %61 = arith.addf %59, %60 : vector<48x32xf32>
    %cst_24 = arith.constant dense<0xFF800000> : vector<32xf32>
    %62 = vector.multi_reduction <maximumf>, %61, %cst_24 [0] : vector<48x32xf32> to vector<32xf32>
    %63 = vector.shape_cast %62 : vector<32xf32> to vector<1x32xf32>
    %64 = vector.broadcast %63 : vector<1x32xf32> to vector<48x32xf32>
    %65 = arith.subf %61, %64 : vector<48x32xf32>
    %66 = vector.broadcast %54 : f32 to vector<48x32xf32>
    %67 = arith.mulf %66, %65 : vector<48x32xf32>
    %68 = math.exp %67 : vector<48x32xf32>
    %69 = arith.mulf %68, %61 : vector<48x32xf32>
    %cst_25 = arith.constant dense<0.000000e+00> : vector<16x32xf32>
    %70 = tpu.matmul %14, %69, %cst_25 {dimension_numbers = #tpu.dot_dimension_numbers<[1], [0], [0], [1], [0, 0, 1, 1], [], []>} : vector<16x48xf32>, vector<48x32xf32>, vector<16x32xf32> -> vector<16x32xf32>
    %cst_26 = arith.constant dense<0.000000e+00> : vector<16x32xf32>
    %71 = tpu.matmul %14, %68, %cst_26 {dimension_numbers = #tpu.dot_dimension_numbers<[1], [0], [0], [1], [0, 0, 1, 1], [], []>} : vector<16x48xf32>, vector<48x32xf32>, vector<16x32xf32> -> vector<16x32xf32>
    %cst_27 = arith.constant 1.000000e-16 : f32
    %72 = vector.broadcast %cst_27 : f32 to vector<16x32xf32>
    %73 = arith.addf %71, %72 : vector<16x32xf32>
    %cst_28 = arith.constant 1.000000e+00 : f32
    %74 = vector.broadcast %cst_28 : f32 to vector<16x32xf32>
    %75 = arith.divf %74, %73 : vector<16x32xf32>
    %76 = arith.mulf %70, %75 : vector<16x32xf32>
    %77 = arith.addf %76, %52 : vector<16x32xf32>
    %c0_29 = arith.constant 0 : index
    %c0_30 = arith.constant 0 : index
    %c0_31 = arith.constant 0 : index
    %78 = vector.load %arg12[%c0_29, %c0_30, %c0_31] : memref<1x32x64xf32, #tpu.memory_space<vmem>>, vector<1x32x64xf32>
    %79 = vector.shape_cast %78 : vector<1x32x64xf32> to vector<32x64xf32>
    %cst_32 = arith.constant dense<0.000000e+00> : vector<16x64xf32>
    %80 = tpu.matmul %77, %79, %cst_32 {dimension_numbers = #tpu.dot_dimension_numbers<[1], [0], [0], [1], [0, 0, 1, 1], [], []>} : vector<16x32xf32>, vector<32x64xf32>, vector<16x64xf32> -> vector<16x64xf32>
    %c0_33 = arith.constant 0 : index
    %c0_34 = arith.constant 0 : index
    %c0_35 = arith.constant 0 : index
    %81 = vector.load %arg13[%c0_33, %c0_34, %c0_35] : memref<1x1x64xf32, #tpu.memory_space<vmem>>, vector<1x1x64xf32>
    %82 = vector.shape_cast %81 : vector<1x1x64xf32> to vector<1x64xf32>
    %83 = vector.broadcast %82 : vector<1x64xf32> to vector<16x64xf32>
    %84 = arith.addf %80, %83 : vector<16x64xf32>
    %c0_36 = arith.constant 0 : index
    %c0_37 = arith.constant 0 : index
    %c0_38 = arith.constant 0 : index
    %85 = vector.load %arg14[%c0_36, %c0_37, %c0_38] : memref<1x1x64xf32, #tpu.memory_space<vmem>>, vector<1x1x64xf32>
    %86 = vector.shape_cast %85 : vector<1x1x64xf32> to vector<1x64xf32>
    %c0_39 = arith.constant 0 : index
    %c0_40 = arith.constant 0 : index
    %c0_41 = arith.constant 0 : index
    %87 = vector.load %arg15[%c0_39, %c0_40, %c0_41] : memref<1x1x64xf32, #tpu.memory_space<vmem>>, vector<1x1x64xf32>
    %88 = vector.shape_cast %87 : vector<1x1x64xf32> to vector<1x64xf32>
    %cst_42 = arith.constant dense<0.000000e+00> : vector<16xf32>
    %89 = vector.multi_reduction <add>, %84, %cst_42 [1] : vector<16x64xf32> to vector<16xf32>
    %90 = vector.shape_cast %89 : vector<16xf32> to vector<16x1xf32>
    %cst_43 = arith.constant 6.400000e+01 : f32
    %91 = vector.broadcast %cst_43 : f32 to vector<16x1xf32>
    %92 = arith.divf %90, %91 : vector<16x1xf32>
    %93 = vector.broadcast %92 : vector<16x1xf32> to vector<16x64xf32>
    %94 = arith.subf %84, %93 : vector<16x64xf32>
    %95 = arith.mulf %94, %94 : vector<16x64xf32>
    %cst_44 = arith.constant dense<0.000000e+00> : vector<16xf32>
    %96 = vector.multi_reduction <add>, %95, %cst_44 [1] : vector<16x64xf32> to vector<16xf32>
    %97 = vector.shape_cast %96 : vector<16xf32> to vector<16x1xf32>
    %cst_45 = arith.constant 6.400000e+01 : f32
    %98 = vector.broadcast %cst_45 : f32 to vector<16x1xf32>
    %99 = arith.divf %97, %98 : vector<16x1xf32>
    %100 = vector.broadcast %92 : vector<16x1xf32> to vector<16x64xf32>
    %101 = arith.subf %84, %100 : vector<16x64xf32>
    %cst_46 = arith.constant 9.99999974E-6 : f32
    %102 = vector.broadcast %cst_46 : f32 to vector<16x1xf32>
    %103 = arith.addf %99, %102 : vector<16x1xf32>
    %104 = math.rsqrt %103 : vector<16x1xf32>
    %105 = vector.broadcast %104 : vector<16x1xf32> to vector<16x64xf32>
    %106 = arith.mulf %101, %105 : vector<16x64xf32>
    %107 = vector.broadcast %86 : vector<1x64xf32> to vector<16x64xf32>
    %108 = arith.mulf %106, %107 : vector<16x64xf32>
    %109 = vector.broadcast %88 : vector<1x64xf32> to vector<16x64xf32>
    %110 = arith.addf %108, %109 : vector<16x64xf32>
    %cst_47 = arith.constant 0.000000e+00 : f32
    %111 = vector.broadcast %cst_47 : f32 to vector<16x64xf32>
    %112 = arith.maximumf %110, %111 : vector<16x64xf32>
    %c0_48 = arith.constant 0 : index
    %c0_49 = arith.constant 0 : index
    %c0_50 = arith.constant 0 : index
    %113 = vector.load %arg16[%c0_48, %c0_49, %c0_50] : memref<1x64x32xf32, #tpu.memory_space<vmem>>, vector<1x64x32xf32>
    %114 = vector.shape_cast %113 : vector<1x64x32xf32> to vector<64x32xf32>
    %cst_51 = arith.constant dense<0.000000e+00> : vector<16x32xf32>
    %115 = tpu.matmul %112, %114, %cst_51 {dimension_numbers = #tpu.dot_dimension_numbers<[1], [0], [0], [1], [0, 0, 1, 1], [], []>} : vector<16x64xf32>, vector<64x32xf32>, vector<16x32xf32> -> vector<16x32xf32>
    %c0_52 = arith.constant 0 : index
    %c0_53 = arith.constant 0 : index
    %c0_54 = arith.constant 0 : index
    %116 = vector.load %arg17[%c0_52, %c0_53, %c0_54] : memref<1x1x32xf32, #tpu.memory_space<vmem>>, vector<1x1x32xf32>
    %117 = vector.shape_cast %116 : vector<1x1x32xf32> to vector<1x32xf32>
    %118 = vector.broadcast %117 : vector<1x32xf32> to vector<16x32xf32>
    %119 = arith.addf %115, %118 : vector<16x32xf32>
    %cst_55 = arith.constant 1.000000e+00 : f32
    %120 = arith.subf %cst_55, %46 : f32
    %121 = vector.broadcast %120 : f32 to vector<16x32xf32>
    %122 = arith.mulf %121, %15 : vector<16x32xf32>
    %123 = arith.addf %119, %122 : vector<16x32xf32>
    %c0_56 = arith.constant 0 : index
    %c0_57 = arith.constant 0 : index
    %124 = vector.load %arg23[%c0_56, %c0_57] : memref<16x32xf32, #tpu.memory_space<vmem>>, vector<16x32xf32>
    tpu.vector_store %arg23[%c0_56, %c0_57], %123 {strides = array<i32>} : memref<16x32xf32, #tpu.memory_space<vmem>>, vector<16x32xf32>,
    %c2_i32 = arith.constant 2 : i32
    %125 = arith.cmpi eq, %arg0, %c2_i32 : i32
    %126 = arith.extui %125 : i1 to i32
    %c0_i32_58 = arith.constant 0 : i32
    %127 = arith.cmpi ne, %126, %c0_i32_58 : i32
    scf.if %127 {
      %c0_59 = arith.constant 0 : index
      %c0_60 = arith.constant 0 : index
      %128 = vector.load %arg18[%c0_59, %c0_60] : memref<1x32xf32, #tpu.memory_space<vmem>>, vector<1x32xf32>
      %c0_61 = arith.constant 0 : index
      %c0_62 = arith.constant 0 : index
      %129 = vector.load %arg19[%c0_61, %c0_62] : memref<1x32xf32, #tpu.memory_space<vmem>>, vector<1x32xf32>
      %cst_63 = arith.constant dense<0.000000e+00> : vector<16xf32>
      %130 = vector.multi_reduction <add>, %123, %cst_63 [1] : vector<16x32xf32> to vector<16xf32>
      %131 = vector.shape_cast %130 : vector<16xf32> to vector<16x1xf32>
      %cst_64 = arith.constant 3.200000e+01 : f32
      %132 = vector.broadcast %cst_64 : f32 to vector<16x1xf32>
      %133 = arith.divf %131, %132 : vector<16x1xf32>
      %134 = vector.broadcast %133 : vector<16x1xf32> to vector<16x32xf32>
      %135 = arith.subf %123, %134 : vector<16x32xf32>
      %136 = arith.mulf %135, %135 : vector<16x32xf32>
      %cst_65 = arith.constant dense<0.000000e+00> : vector<16xf32>
      %137 = vector.multi_reduction <add>, %136, %cst_65 [1] : vector<16x32xf32> to vector<16xf32>
      %138 = vector.shape_cast %137 : vector<16xf32> to vector<16x1xf32>
      %cst_66 = arith.constant 3.200000e+01 : f32
      %139 = vector.broadcast %cst_66 : f32 to vector<16x1xf32>
      %140 = arith.divf %138, %139 : vector<16x1xf32>
      %141 = vector.broadcast %133 : vector<16x1xf32> to vector<16x32xf32>
      %142 = arith.subf %123, %141 : vector<16x32xf32>
      %cst_67 = arith.constant 9.99999974E-6 : f32
      %143 = vector.broadcast %cst_67 : f32 to vector<16x1xf32>
      %144 = arith.addf %140, %143 : vector<16x1xf32>
      %145 = math.rsqrt %144 : vector<16x1xf32>
      %146 = vector.broadcast %145 : vector<16x1xf32> to vector<16x32xf32>
      %147 = arith.mulf %142, %146 : vector<16x32xf32>
      %148 = vector.broadcast %128 : vector<1x32xf32> to vector<16x32xf32>
      %149 = arith.mulf %147, %148 : vector<16x32xf32>
      %150 = vector.broadcast %129 : vector<1x32xf32> to vector<16x32xf32>
      %151 = arith.addf %149, %150 : vector<16x32xf32>
      %cst_68 = arith.constant 0.000000e+00 : f32
      %152 = vector.broadcast %cst_68 : f32 to vector<16x32xf32>
      %153 = arith.maximumf %151, %152 : vector<16x32xf32>
      %c0_69 = arith.constant 0 : index
      %c0_70 = arith.constant 0 : index
      %154 = vector.load %arg20[%c0_69, %c0_70] : memref<32x128xf32, #tpu.memory_space<vmem>>, vector<32x128xf32>
      %cst_71 = arith.constant dense<0.000000e+00> : vector<16x128xf32>
      %155 = tpu.matmul %153, %154, %cst_71 {dimension_numbers = #tpu.dot_dimension_numbers<[1], [0], [0], [1], [0, 0, 1, 1], [], []>} : vector<16x32xf32>, vector<32x128xf32>, vector<16x128xf32> -> vector<16x128xf32>
      %c0_72 = arith.constant 0 : index
      %c0_73 = arith.constant 0 : index
      %156 = vector.load %arg21[%c0_72, %c0_73] : memref<1x128xf32, #tpu.memory_space<vmem>>, vector<1x128xf32>
      %157 = vector.broadcast %156 : vector<1x128xf32> to vector<16x128xf32>
      %158 = arith.addf %155, %157 : vector<16x128xf32>
      %c0_74 = arith.constant 0 : index
      %c0_75 = arith.constant 0 : index
      %159 = vector.load %arg22[%c0_74, %c0_75] : memref<16x128xf32, #tpu.memory_space<vmem>>, vector<16x128xf32>
      tpu.vector_store %arg22[%c0_74, %c0_75], %158 {strides = array<i32>} : memref<16x128xf32, #tpu.memory_space<vmem>>, vector<16x128xf32>,
    } else {
    }
    return
  }
  func.func @transform_0(%arg0: i32) -> i32 {
    %c0_i32 = arith.constant 0 : i32
    %c0_i32_0 = arith.constant 0 : i32
    return %c0_i32 : i32
  }
  func.func @transform_1(%arg0: i32) -> (i32, i32) {
    %c0_i32 = arith.constant 0 : i32
    %c0_i32_0 = arith.constant 0 : i32
    %c0_i32_1 = arith.constant 0 : i32
    return %c0_i32, %c0_i32_0 : i32, i32
  }
  func.func @transform_2(%arg0: i32) -> (i32, i32) {
    %c0_i32 = arith.constant 0 : i32
    %c0_i32_0 = arith.constant 0 : i32
    %c0_i32_1 = arith.constant 0 : i32
    return %c0_i32, %c0_i32_0 : i32, i32
  }
  func.func @transform_3(%arg0: i32) -> (i32, i32) {
    %c0_i32 = arith.constant 0 : i32
    %c0_i32_0 = arith.constant 0 : i32
    %c0_i32_1 = arith.constant 0 : i32
    return %c0_i32, %c0_i32_0 : i32, i32
  }
  func.func @transform_4(%arg0: i32) -> (i32, i32) {
    %c0_i32 = arith.constant 0 : i32
    %c0_i32_0 = arith.constant 0 : i32
    %c0_i32_1 = arith.constant 0 : i32
    return %c0_i32, %c0_i32_0 : i32, i32
  }
  func.func @transform_5(%arg0: i32) -> (i32, i32) {
    %c0_i32 = arith.constant 0 : i32
    %c0_i32_0 = arith.constant 0 : i32
    %c0_i32_1 = arith.constant 0 : i32
    return %c0_i32, %c0_i32_0 : i32, i32
  }
  func.func @transform_6(%arg0: i32) -> (i32, i32) {
    %c0_i32 = arith.constant 0 : i32
    %c0_i32_0 = arith.constant 0 : i32
    %c0_i32_1 = arith.constant 0 : i32
    return %c0_i32, %c0_i32_0 : i32, i32
  }
  func.func @transform_7(%arg0: i32) -> (i32, i32) {
    %c0_i32 = arith.constant 0 : i32
    %c0_i32_0 = arith.constant 0 : i32
    %c0_i32_1 = arith.constant 0 : i32
    return %c0_i32, %c0_i32_0 : i32, i32
  }
  func.func @transform_8(%arg0: i32) -> (i32, i32) {
    %c0_i32 = arith.constant 0 : i32
    %c0_i32_0 = arith.constant 0 : i32
    %c0_i32_1 = arith.constant 0 : i32
    return %c0_i32, %c0_i32_0 : i32, i32
  }
  func.func @transform_9(%arg0: i32) -> (i32, i32, i32) {
    %c0_i32 = arith.constant 0 : i32
    %c0_i32_0 = arith.constant 0 : i32
    %c0_i32_1 = arith.constant 0 : i32
    return %arg0, %c0_i32, %c0_i32_0 : i32, i32, i32
  }
  func.func @transform_10(%arg0: i32) -> (i32, i32, i32) {
    %c0_i32 = arith.constant 0 : i32
    %c0_i32_0 = arith.constant 0 : i32
    %c0_i32_1 = arith.constant 0 : i32
    return %arg0, %c0_i32, %c0_i32_0 : i32, i32, i32
  }
  func.func @transform_11(%arg0: i32) -> (i32, i32, i32) {
    %c0_i32 = arith.constant 0 : i32
    %c0_i32_0 = arith.constant 0 : i32
    %c0_i32_1 = arith.constant 0 : i32
    return %arg0, %c0_i32, %c0_i32_0 : i32, i32, i32
  }
  func.func @transform_12(%arg0: i32) -> (i32, i32, i32) {
    %c0_i32 = arith.constant 0 : i32
    %c0_i32_0 = arith.constant 0 : i32
    %c0_i32_1 = arith.constant 0 : i32
    return %arg0, %c0_i32, %c0_i32_0 : i32, i32, i32
  }
  func.func @transform_13(%arg0: i32) -> (i32, i32, i32) {
    %c0_i32 = arith.constant 0 : i32
    %c0_i32_0 = arith.constant 0 : i32
    %c0_i32_1 = arith.constant 0 : i32
    return %arg0, %c0_i32, %c0_i32_0 : i32, i32, i32
  }
  func.func @transform_14(%arg0: i32) -> (i32, i32, i32) {
    %c0_i32 = arith.constant 0 : i32
    %c0_i32_0 = arith.constant 0 : i32
    %c0_i32_1 = arith.constant 0 : i32
    return %arg0, %c0_i32, %c0_i32_0 : i32, i32, i32
  }
  func.func @transform_15(%arg0: i32) -> (i32, i32, i32) {
    %c0_i32 = arith.constant 0 : i32
    %c0_i32_0 = arith.constant 0 : i32
    %c0_i32_1 = arith.constant 0 : i32
    return %arg0, %c0_i32, %c0_i32_0 : i32, i32, i32
  }
  func.func @transform_16(%arg0: i32) -> (i32, i32, i32) {
    %c0_i32 = arith.constant 0 : i32
    %c0_i32_0 = arith.constant 0 : i32
    %c0_i32_1 = arith.constant 0 : i32
    return %arg0, %c0_i32, %c0_i32_0 : i32, i32, i32
  }
  func.func @transform_17(%arg0: i32) -> (i32, i32) {
    %c0_i32 = arith.constant 0 : i32
    %c0_i32_0 = arith.constant 0 : i32
    %c0_i32_1 = arith.constant 0 : i32
    return %c0_i32, %c0_i32_0 : i32, i32
  }
  func.func @transform_18(%arg0: i32) -> (i32, i32) {
    %c0_i32 = arith.constant 0 : i32
    %c0_i32_0 = arith.constant 0 : i32
    %c0_i32_1 = arith.constant 0 : i32
    return %c0_i32, %c0_i32_0 : i32, i32
  }
  func.func @transform_19(%arg0: i32) -> (i32, i32) {
    %c0_i32 = arith.constant 0 : i32
    %c0_i32_0 = arith.constant 0 : i32
    %c0_i32_1 = arith.constant 0 : i32
    return %c0_i32, %c0_i32_0 : i32, i32
  }
  func.func @transform_20(%arg0: i32) -> (i32, i32) {
    %c0_i32 = arith.constant 0 : i32
    %c0_i32_0 = arith.constant 0 : i32
    %c0_i32_1 = arith.constant 0 : i32
    return %c0_i32, %c0_i32_0 : i32, i32
  }
  func.func @transform_21(%arg0: i32) -> (i32, i32) {
    %c0_i32 = arith.constant 0 : i32
    %c0_i32_0 = arith.constant 0 : i32
    %c0_i32_1 = arith.constant 0 : i32
    return %c0_i32, %c0_i32_0 : i32, i32
  }
}

</mosaic_0001>

<llo_original>
// kernel: gen_forward.1
$region0: #{gen_forward.1}
  #allocation0 [shape = 'u32[]', space=smem, size = 0x4, offset = 0x4, fixed_abs, tag = 'smem constant byte address 0x4 - core index']
  #allocation1 [shape = 'u32[144,128]{1,0:T(1,128)}', space=vmem, size = 0x12000, scoped, tag = 'internal scratch']
  #allocation2 [shape = 'f32[16,32]{1,0:T(8,128)}', space=vmem, size = 0x2000, scoped, tag = 'scratch operand']
  #allocation3 [shape = 'f32[48,32]{1,0:T(8,128)}', space=vmem, size = 0x6000, scoped, tag = 'scratch operand']
  %s0 = inlined_call_operand.vmem [shape: f32[3], index: 0, kind: input, shape index: {}]
  %s1 = inlined_call_operand.vmem [shape: f32[16,8], index: 1, kind: input, shape index: {}]
  %s2 = inlined_call_operand.vmem [shape: f32[48,8], index: 2, kind: input, shape index: {}]
  %s3 = inlined_call_operand.vmem [shape: s32[48,1], index: 3, kind: input, shape index: {}]
  %s4 = inlined_call_operand.vmem [shape: s32[1,48], index: 4, kind: input, shape index: {}]
  %s5 = inlined_call_operand.vmem [shape: f32[8,32], index: 5, kind: input, shape index: {}]
  %s6 = inlined_call_operand.vmem [shape: f32[1,32], index: 6, kind: input, shape index: {}]
  %s7 = inlined_call_operand.vmem [shape: f32[8,32], index: 7, kind: input, shape index: {}]
  %s8 = inlined_call_operand.vmem [shape: f32[1,32], index: 8, kind: input, shape index: {}]
  %s9 = inlined_call_operand.vmem [shape: f32[3,1,32], index: 9, kind: input, shape index: {}]
  %s10 = inlined_call_operand.vmem [shape: f32[3,1,32], index: 10, kind: input, shape index: {}]
  %s11 = inlined_call_operand.vmem [shape: f32[3,32,64], index: 11, kind: input, shape index: {}]
  %s12 = inlined_call_operand.vmem [shape: f32[3,1,64], index: 12, kind: input, shape index: {}]
  %s13 = inlined_call_operand.vmem [shape: f32[3,1,64], index: 13, kind: input, shape index: {}]
  %s14 = inlined_call_operand.vmem [shape: f32[3,1,64], index: 14, kind: input, shape index: {}]
  %s15 = inlined_call_operand.vmem [shape: f32[3,64,32], index: 15, kind: input, shape index: {}]
  %s16 = inlined_call_operand.vmem [shape: f32[3,1,32], index: 16, kind: input, shape index: {}]
  %s17 = inlined_call_operand.vmem [shape: f32[1,32], index: 17, kind: input, shape index: {}]
  %s18 = inlined_call_operand.vmem [shape: f32[1,32], index: 18, kind: input, shape index: {}]
  %s19 = inlined_call_operand.vmem [shape: f32[32,128], index: 19, kind: input, shape index: {}]
  %s20 = inlined_call_operand.vmem [shape: f32[1,128], index: 20, kind: input, shape index: {}]
  %s21 = inlined_call_operand.hbm [shape: f32[16,128], index: 21, kind: output, shape index: {}]
  %s22 = sld [smem:[#allocation0]]
  $region129: #{gen_forward.1} parent=0
    _
  %s24 = ssub.s32 1, %s22
  %s25 = scalar_select 0, %s24, %s22
  $region1: #{gen_forward.1} parent=0
    #allocation4 [shape = 'u8[512]{0}', space=smem, size = 0x200, scoped, tag = 'input window, operand 0, single buffered']
    #allocation5 [shape = 's32[2]{0}', space=sflag, size = 0x8, scoped, tag = 'scoped memory for gen_forward.1']
    #allocation6 [shape = 's32[2]{0}', space=sflag, size = 0x8, scoped, tag = 'scoped memory for gen_forward.1']
    #allocation7 [shape = 'u8[8192]{0}', space=vmem, size = 0x2000, scoped, tag = 'output window, operand 0, single buffered']
    %26 = vsyncpa [#allocation6], 0
    %27 = vsyncpa [#allocation5], 0
    loop: start=0, step=1, limit=5
    $region2: #{gen_forward.1} parent=1 // loop_pre_header
      _
    $region3: #{gen_forward.1} parent=1 // loop_header
      %s29 = sphi 0, %s33
      %p30 = scmp.ge.s32.totalorder %s29, 5
      %s37 = sphi 0, %s37
      %s39 = sphi 0, %s37
      %s40 = sphi 0, %s39
      %s54 = sphi 0, %s40
      %s58 = sphi 0, %s58
      %s60 = sphi 0, %s58
      %s61 = sphi 0, %s60
      %s75 = sphi 0, %s61
      %s79 = sphi 0, %s79
      %s81 = sphi 0, %s79
      %s82 = sphi 0, %s81
      %s96 = sphi 0, %s82
      %s100 = sphi 0, %s100
      %s102 = sphi 0, %s100
      %s103 = sphi 0, %s102
      %s117 = sphi 0, %s103
      %s121 = sphi 0, %s121
      %s123 = sphi 0, %s121
      %s124 = sphi 0, %s123
      %s138 = sphi 0, %s124
      %s142 = sphi 0, %s142
      %s144 = sphi 0, %s142
      %s145 = sphi 0, %s144
      %s159 = sphi 0, %s145
      %s163 = sphi 0, %s163
      %s165 = sphi 0, %s163
      %s166 = sphi 0, %s165
      %s180 = sphi 0, %s166
      %s184 = sphi 0, %s184
      %s186 = sphi 0, %s184
      %s187 = sphi 0, %s186
      %s201 = sphi 0, %s187
      %s205 = sphi 0, %s205
      %s207 = sphi 0, %s205
      %s208 = sphi 0, %s207
      %s222 = sphi 0, %s208
      %s228 = sphi 0, %s230
      %s231 = sphi 0, %s228
      %s232 = sphi 0, %s231
      %s248 = sphi 0, %s232
      %s254 = sphi 0, %s256
      %s257 = sphi 0, %s254
      %s258 = sphi 0, %s257
      %s274 = sphi 0, %s258
      %s280 = sphi 0, %s282
      %s283 = sphi 0, %s280
      %s284 = sphi 0, %s283
      %s300 = sphi 0, %s284
      %s306 = sphi 0, %s308
      %s309 = sphi 0, %s306
      %s310 = sphi 0, %s309
      %s326 = sphi 0, %s310
      %s332 = sphi 0, %s334
      %s335 = sphi 0, %s332
      %s336 = sphi 0, %s335
      %s352 = sphi 0, %s336
      %s358 = sphi 0, %s360
      %s361 = sphi 0, %s358
      %s362 = sphi 0, %s361
      %s378 = sphi 0, %s362
      %s384 = sphi 0, %s386
      %s387 = sphi 0, %s384
      %s388 = sphi 0, %s387
      %s404 = sphi 0, %s388
      %s410 = sphi 0, %s412
      %s413 = sphi 0, %s410
      %s414 = sphi 0, %s413
      %s430 = sphi 0, %s414
      %s434 = sphi 0, %s434
      %s436 = sphi 0, %s434
      %s437 = sphi 0, %s436
      %s451 = sphi 0, %s437
      %s455 = sphi 0, %s455
      %s457 = sphi 0, %s455
      %s458 = sphi 0, %s457
      %s472 = sphi 0, %s458
      %s476 = sphi 0, %s476
      %s478 = sphi 0, %s476
      %s479 = sphi 0, %s478
      %s493 = sphi 0, %s479
      %s497 = sphi 0, %s497
      %s499 = sphi 0, %s497
      %s500 = sphi 0, %s499
      %s514 = sphi 0, %s500
      %s518 = sphi 0, %s518
      %s520 = sphi 0, %s518
      %s521 = sphi 0, %s520
      %s535 = sphi 0, %s521
    $region4: #{gen_forward.1} parent=1 // loop_header_branch
      %32 = sbr.rel (%p30) target = $region8
    $region5: #{gen_forward.1} parent=1 // loop_body
      %s34 = ssub.s32 %s29, 1
      %s35 = ssub.s32 %s29, 2
      %s36 = sadd.s32 %s29, 1
      %s38 = sadd.s32 %s37, 1
      %p41 = scmp.eq.s32.totalorder %s29, 2
      %p42 = scmp.ne.s32.totalorder %s37, %s39
      %p43 = scmp.eq.s32.totalorder %s29, 0
      %p44 = por %p42, %p43
      %p45 = scmp.ne.s32.totalorder %s37, %s39
      %p46 = scmp.eq.s32.totalorder %s34, 2
      %p47 = por %p45, %p46
      %p48 = scmp.ne.s32.totalorder %s39, %s40
      %p49 = scmp.eq.s32.totalorder %s34, 0
      %p50 = por %p48, %p49
      %p51 = scmp.ne.s32.totalorder %s39, %s40
      %p52 = scmp.eq.s32.totalorder %s35, 2
      %p53 = por %p51, %p52
      %p55 = scmp.ne.s32.totalorder %s40, %s54
      %p56 = scmp.eq.s32.totalorder %s35, 0
      %p57 = por %p55, %p56
      %s59 = sadd.s32 %s58, 1
      %p62 = scmp.eq.s32.totalorder %s29, 2
      %p63 = scmp.ne.s32.totalorder %s58, %s60
      %p64 = scmp.eq.s32.totalorder %s29, 0
      %p65 = por %p63, %p64
      %p66 = scmp.ne.s32.totalorder %s58, %s60
      %p67 = scmp.eq.s32.totalorder %s34, 2
      %p68 = por %p66, %p67
      %p69 = scmp.ne.s32.totalorder %s60, %s61
      %p70 = scmp.eq.s32.totalorder %s34, 0
      %p71 = por %p69, %p70
      %p72 = scmp.ne.s32.totalorder %s60, %s61
      %p73 = scmp.eq.s32.totalorder %s35, 2
      %p74 = por %p72, %p73
      %p76 = scmp.ne.s32.totalorder %s61, %s75
      %p77 = scmp.eq.s32.totalorder %s35, 0
      %p78 = por %p76, %p77
      %s80 = sadd.s32 %s79, 1
      %p83 = scmp.eq.s32.totalorder %s29, 2
      %p84 = scmp.ne.s32.totalorder %s79, %s81
      %p85 = scmp.eq.s32.totalorder %s29, 0
      %p86 = por %p84, %p85
      %p87 = scmp.ne.s32.totalorder %s79, %s81
      %p88 = scmp.eq.s32.totalorder %s34, 2
      %p89 = por %p87, %p88
      %p90 = scmp.ne.s32.totalorder %s81, %s82
      %p91 = scmp.eq.s32.totalorder %s34, 0
      %p92 = por %p90, %p91
      %p93 = scmp.ne.s32.totalorder %s81, %s82
      %p94 = scmp.eq.s32.totalorder %s35, 2
      %p95 = por %p93, %p94
      %p97 = scmp.ne.s32.totalorder %s82, %s96
      %p98 = scmp.eq.s32.totalorder %s35, 0
      %p99 = por %p97, %p98
      %s101 = sadd.s32 %s100, 1
      %p104 = scmp.eq.s32.totalorder %s29, 2
      %p105 = scmp.ne.s32.totalorder %s100, %s102
      %p106 = scmp.eq.s32.totalorder %s29, 0
      %p107 = por %p105, %p106
      %p108 = scmp.ne.s32.totalorder %s100, %s102
      %p109 = scmp.eq.s32.totalorder %s34, 2
      %p110 = por %p108, %p109
      %p111 = scmp.ne.s32.totalorder %s102, %s103
      %p112 = scmp.eq.s32.totalorder %s34, 0
      %p113 = por %p111, %p112
      %p114 = scmp.ne.s32.totalorder %s102, %s103
      %p115 = scmp.eq.s32.totalorder %s35, 2
      %p116 = por %p114, %p115
      %p118 = scmp.ne.s32.totalorder %s103, %s117
      %p119 = scmp.eq.s32.totalorder %s35, 0
      %p120 = por %p118, %p119
      %s122 = sadd.s32 %s121, 1
      %p125 = scmp.eq.s32.totalorder %s29, 2
      %p126 = scmp.ne.s32.totalorder %s121, %s123
      %p127 = scmp.eq.s32.totalorder %s29, 0
      %p128 = por %p126, %p127
      %p129 = scmp.ne.s32.totalorder %s121, %s123
      %p130 = scmp.eq.s32.totalorder %s34, 2
      %p131 = por %p129, %p130
      %p132 = scmp.ne.s32.totalorder %s123, %s124
      %p133 = scmp.eq.s32.totalorder %s34, 0
      %p134 = por %p132, %p133
      %p135 = scmp.ne.s32.totalorder %s123, %s124
      %p136 = scmp.eq.s32.totalorder %s35, 2
      %p137 = por %p135, %p136
      %p139 = scmp.ne.s32.totalorder %s124, %s138
      %p140 = scmp.eq.s32.totalorder %s35, 0
      %p141 = por %p139, %p140
      %s143 = sadd.s32 %s142, 1
      %p146 = scmp.eq.s32.totalorder %s29, 2
      %p147 = scmp.ne.s32.totalorder %s142, %s144
      %p148 = scmp.eq.s32.totalorder %s29, 0
      %p149 = por %p147, %p148
      %p150 = scmp.ne.s32.totalorder %s142, %s144
      %p151 = scmp.eq.s32.totalorder %s34, 2
      %p152 = por %p150, %p151
      %p153 = scmp.ne.s32.totalorder %s144, %s145
      %p154 = scmp.eq.s32.totalorder %s34, 0
      %p155 = por %p153, %p154
      %p156 = scmp.ne.s32.totalorder %s144, %s145
      %p157 = scmp.eq.s32.totalorder %s35, 2
      %p158 = por %p156, %p157
      %p160 = scmp.ne.s32.totalorder %s145, %s159
      %p161 = scmp.eq.s32.totalorder %s35, 0
      %p162 = por %p160, %p161
      %s164 = sadd.s32 %s163, 1
      %p167 = scmp.eq.s32.totalorder %s29, 2
      %p168 = scmp.ne.s32.totalorder %s163, %s165
      %p169 = scmp.eq.s32.totalorder %s29, 0
      %p170 = por %p168, %p169
      %p171 = scmp.ne.s32.totalorder %s163, %s165
      %p172 = scmp.eq.s32.totalorder %s34, 2
      %p173 = por %p171, %p172
      %p174 = scmp.ne.s32.totalorder %s165, %s166
      %p175 = scmp.eq.s32.totalorder %s34, 0
      %p176 = por %p174, %p175
      %p177 = scmp.ne.s32.totalorder %s165, %s166
      %p178 = scmp.eq.s32.totalorder %s35, 2
      %p179 = por %p177, %p178
      %p181 = scmp.ne.s32.totalorder %s166, %s180
      %p182 = scmp.eq.s32.totalorder %s35, 0
      %p183 = por %p181, %p182
      %s185 = sadd.s32 %s184, 1
      %p188 = scmp.eq.s32.totalorder %s29, 2
      %p189 = scmp.ne.s32.totalorder %s184, %s186
      %p190 = scmp.eq.s32.totalorder %s29, 0
      %p191 = por %p189, %p190
      %p192 = scmp.ne.s32.totalorder %s184, %s186
      %p193 = scmp.eq.s32.totalorder %s34, 2
      %p194 = por %p192, %p193
      %p195 = scmp.ne.s32.totalorder %s186, %s187
      %p196 = scmp.eq.s32.totalorder %s34, 0
      %p197 = por %p195, %p196
      %p198 = scmp.ne.s32.totalorder %s186, %s187
      %p199 = scmp.eq.s32.totalorder %s35, 2
      %p200 = por %p198, %p199
      %p202 = scmp.ne.s32.totalorder %s187, %s201
      %p203 = scmp.eq.s32.totalorder %s35, 0
      %p204 = por %p202, %p203
      %s206 = sadd.s32 %s205, 1
      %p209 = scmp.eq.s32.totalorder %s29, 2
      %p210 = scmp.ne.s32.totalorder %s205, %s207
      %p211 = scmp.eq.s32.totalorder %s29, 0
      %p212 = por %p210, %p211
      %p213 = scmp.ne.s32.totalorder %s205, %s207
      %p214 = scmp.eq.s32.totalorder %s34, 2
      %p215 = por %p213, %p214
      %p216 = scmp.ne.s32.totalorder %s207, %s208
      %p217 = scmp.eq.s32.totalorder %s34, 0
      %p218 = por %p216, %p217
      %p219 = scmp.ne.s32.totalorder %s207, %s208
      %p220 = scmp.eq.s32.totalorder %s35, 2
      %p221 = por %p219, %p220
      %p223 = scmp.ne.s32.totalorder %s208, %s222
      %p224 = scmp.eq.s32.totalorder %s35, 0
      %p225 = por %p223, %p224
      %s226 = ssub.s32 %s29, %s36
      %p227 = scmp.eq.s32.totalorder %s226, 0
      %s229 = sadd.s32 %s228, 1
      %s230 = scalar_select %p227, %s228, %s229
      %p233 = pneg %p227
      %p234 = scmp.eq.s32.totalorder %s29, 2
      %p235 = por %p233, %p234
      %p236 = scmp.ne.s32.totalorder %s228, %s231
      %p237 = scmp.eq.s32.totalorder %s29, 0
      %p238 = por %p236, %p237
      %p239 = scmp.ne.s32.totalorder %s228, %s231
      %p240 = scmp.eq.s32.totalorder %s34, 2
      %p241 = por %p239, %p240
      %p242 = scmp.ne.s32.totalorder %s231, %s232
      %p243 = scmp.eq.s32.totalorder %s34, 0
      %p244 = por %p242, %p243
      %p245 = scmp.ne.s32.totalorder %s231, %s232
      %p246 = scmp.eq.s32.totalorder %s35, 2
      %p247 = por %p245, %p246
      %p249 = scmp.ne.s32.totalorder %s232, %s248
      %p250 = scmp.eq.s32.totalorder %s35, 0
      %p251 = por %p249, %p250
      %s252 = ssub.s32 %s29, %s36
      %p253 = scmp.eq.s32.totalorder %s252, 0
      %s255 = sadd.s32 %s254, 1
      %s256 = scalar_select %p253, %s254, %s255
      %p259 = pneg %p253
      %p260 = scmp.eq.s32.totalorder %s29, 2
      %p261 = por %p259, %p260
      %p262 = scmp.ne.s32.totalorder %s254, %s257
      %p263 = scmp.eq.s32.totalorder %s29, 0
      %p264 = por %p262, %p263
      %p265 = scmp.ne.s32.totalorder %s254, %s257
      %p266 = scmp.eq.s32.totalorder %s34, 2
      %p267 = por %p265, %p266
      %p268 = scmp.ne.s32.totalorder %s257, %s258
      %p269 = scmp.eq.s32.totalorder %s34, 0
      %p270 = por %p268, %p269
      %p271 = scmp.ne.s32.totalorder %s257, %s258
      %p272 = scmp.eq.s32.totalorder %s35, 2
      %p273 = por %p271, %p272
      %p275 = scmp.ne.s32.totalorder %s258, %s274
      %p276 = scmp.eq.s32.totalorder %s35, 0
      %p277 = por %p275, %p276
      %s278 = ssub.s32 %s29, %s36
      %p279 = scmp.eq.s32.totalorder %s278, 0
      %s281 = sadd.s32 %s280, 1
      %s282 = scalar_select %p279, %s280, %s281
      %p285 = pneg %p279
      %p286 = scmp.eq.s32.totalorder %s29, 2
      %p287 = por %p285, %p286
      %p288 = scmp.ne.s32.totalorder %s280, %s283
      %p289 = scmp.eq.s32.totalorder %s29, 0
      %p290 = por %p288, %p289
      %p291 = scmp.ne.s32.totalorder %s280, %s283
      %p292 = scmp.eq.s32.totalorder %s34, 2
      %p293 = por %p291, %p292
      %p294 = scmp.ne.s32.totalorder %s283, %s284
      %p295 = scmp.eq.s32.totalorder %s34, 0
      %p296 = por %p294, %p295
      %p297 = scmp.ne.s32.totalorder %s283, %s284
      %p298 = scmp.eq.s32.totalorder %s35, 2
      %p299 = por %p297, %p298
      %p301 = scmp.ne.s32.totalorder %s284, %s300
      %p302 = scmp.eq.s32.totalorder %s35, 0
      %p303 = por %p301, %p302
      %s304 = ssub.s32 %s29, %s36
      %p305 = scmp.eq.s32.totalorder %s304, 0
      %s307 = sadd.s32 %s306, 1
      %s308 = scalar_select %p305, %s306, %s307
      %p311 = pneg %p305
      %p312 = scmp.eq.s32.totalorder %s29, 2
      %p313 = por %p311, %p312
      %p314 = scmp.ne.s32.totalorder %s306, %s309
      %p315 = scmp.eq.s32.totalorder %s29, 0
      %p316 = por %p314, %p315
      %p317 = scmp.ne.s32.totalorder %s306, %s309
      %p318 = scmp.eq.s32.totalorder %s34, 2
      %p319 = por %p317, %p318
      %p320 = scmp.ne.s32.totalorder %s309, %s310
      %p321 = scmp.eq.s32.totalorder %s34, 0
      %p322 = por %p320, %p321
      %p323 = scmp.ne.s32.totalorder %s309, %s310
      %p324 = scmp.eq.s32.totalorder %s35, 2
      %p325 = por %p323, %p324
      %p327 = scmp.ne.s32.totalorder %s310, %s326
      %p328 = scmp.eq.s32.totalorder %s35, 0
      %p329 = por %p327, %p328
      %s330 = ssub.s32 %s29, %s36
      %p331 = scmp.eq.s32.totalorder %s330, 0
      %s333 = sadd.s32 %s332, 1
      %s334 = scalar_select %p331, %s332, %s333
      %p337 = pneg %p331
      %p338 = scmp.eq.s32.totalorder %s29, 2
      %p339 = por %p337, %p338
      %p340 = scmp.ne.s32.totalorder %s332, %s335
      %p341 = scmp.eq.s32.totalorder %s29, 0
      %p342 = por %p340, %p341
      %p343 = scmp.ne.s32.totalorder %s332, %s335
      %p344 = scmp.eq.s32.totalorder %s34, 2
      %p345 = por %p343, %p344
      %p346 = scmp.ne.s32.totalorder %s335, %s336
      %p347 = scmp.eq.s32.totalorder %s34, 0
      %p348 = por %p346, %p347
      %p349 = scmp.ne.s32.totalorder %s335, %s336
      %p350 = scmp.eq.s32.totalorder %s35, 2
      %p351 = por %p349, %p350
      %p353 = scmp.ne.s32.totalorder %s336, %s352
      %p354 = scmp.eq.s32.totalorder %s35, 0
      %p355 = por %p353, %p354
      %s356 = ssub.s32 %s29, %s36
      %p357 = scmp.eq.s32.totalorder %s356, 0
      %s359 = sadd.s32 %s358, 1
      %s360 = scalar_select %p357, %s358, %s359
      %p363 = pneg %p357
      %p364 = scmp.eq.s32.totalorder %s29, 2
      %p365 = por %p363, %p364
      %p366 = scmp.ne.s32.totalorder %s358, %s361
      %p367 = scmp.eq.s32.totalorder %s29, 0
      %p368 = por %p366, %p367
      %p369 = scmp.ne.s32.totalorder %s358, %s361
      %p370 = scmp.eq.s32.totalorder %s34, 2
      %p371 = por %p369, %p370
      %p372 = scmp.ne.s32.totalorder %s361, %s362
      %p373 = scmp.eq.s32.totalorder %s34, 0
      %p374 = por %p372, %p373
      %p375 = scmp.ne.s32.totalorder %s361, %s362
      %p376 = scmp.eq.s32.totalorder %s35, 2
      %p377 = por %p375, %p376
      %p379 = scmp.ne.s32.totalorder %s362, %s378
      %p380 = scmp.eq.s32.totalorder %s35, 0
      %p381 = por %p379, %p380
      %s382 = ssub.s32 %s29, %s36
      %p383 = scmp.eq.s32.totalorder %s382, 0
      %s385 = sadd.s32 %s384, 1
      %s386 = scalar_select %p383, %s384, %s385
      %p389 = pneg %p383
      %p390 = scmp.eq.s32.totalorder %s29, 2
      %p391 = por %p389, %p390
      %p392 = scmp.ne.s32.totalorder %s384, %s387
      %p393 = scmp.eq.s32.totalorder %s29, 0
      %p394 = por %p392, %p393
      %p395 = scmp.ne.s32.totalorder %s384, %s387
      %p396 = scmp.eq.s32.totalorder %s34, 2
      %p397 = por %p395, %p396
      %p398 = scmp.ne.s32.totalorder %s387, %s388
      %p399 = scmp.eq.s32.totalorder %s34, 0
      %p400 = por %p398, %p399
      %p401 = scmp.ne.s32.totalorder %s387, %s388
      %p402 = scmp.eq.s32.totalorder %s35, 2
      %p403 = por %p401, %p402
      %p405 = scmp.ne.s32.totalorder %s388, %s404
      %p406 = scmp.eq.s32.totalorder %s35, 0
      %p407 = por %p405, %p406
      %s408 = ssub.s32 %s29, %s36
      %p409 = scmp.eq.s32.totalorder %s408, 0
      %s411 = sadd.s32 %s410, 1
      %s412 = scalar_select %p409, %s410, %s411
      %p415 = pneg %p409
      %p416 = scmp.eq.s32.totalorder %s29, 2
      %p417 = por %p415, %p416
      %p418 = scmp.ne.s32.totalorder %s410, %s413
      %p419 = scmp.eq.s32.totalorder %s29, 0
      %p420 = por %p418, %p419
      %p421 = scmp.ne.s32.totalorder %s410, %s413
      %p422 = scmp.eq.s32.totalorder %s34, 2
      %p423 = por %p421, %p422
      %p424 = scmp.ne.s32.totalorder %s413, %s414
      %p425 = scmp.eq.s32.totalorder %s34, 0
      %p426 = por %p424, %p425
      %p427 = scmp.ne.s32.totalorder %s413, %s414
      %p428 = scmp.eq.s32.totalorder %s35, 2
      %p429 = por %p427, %p428
      %p431 = scmp.ne.s32.totalorder %s414, %s430
      %p432 = scmp.eq.s32.totalorder %s35, 0
      %p433 = por %p431, %p432
      %s435 = sadd.s32 %s434, 1
      %p438 = scmp.eq.s32.totalorder %s29, 2
      %p439 = scmp.ne.s32.totalorder %s434, %s436
      %p440 = scmp.eq.s32.totalorder %s29, 0
      %p441 = por %p439, %p440
      %p442 = scmp.ne.s32.totalorder %s434, %s436
      %p443 = scmp.eq.s32.totalorder %s34, 2
      %p444 = por %p442, %p443
      %p445 = scmp.ne.s32.totalorder %s436, %s437
      %p446 = scmp.eq.s32.totalorder %s34, 0
      %p447 = por %p445, %p446
      %p448 = scmp.ne.s32.totalorder %s436, %s437
      %p449 = scmp.eq.s32.totalorder %s35, 2
      %p450 = por %p448, %p449
      %p452 = scmp.ne.s32.totalorder %s437, %s451
      %p453 = scmp.eq.s32.totalorder %s35, 0
      %p454 = por %p452, %p453
      %s456 = sadd.s32 %s455, 1
      %p459 = scmp.eq.s32.totalorder %s29, 2
      %p460 = scmp.ne.s32.totalorder %s455, %s457
      %p461 = scmp.eq.s32.totalorder %s29, 0
      %p462 = por %p460, %p461
      %p463 = scmp.ne.s32.totalorder %s455, %s457
      %p464 = scmp.eq.s32.totalorder %s34, 2
      %p465 = por %p463, %p464
      %p466 = scmp.ne.s32.totalorder %s457, %s458
      %p467 = scmp.eq.s32.totalorder %s34, 0
      %p468 = por %p466, %p467
      %p469 = scmp.ne.s32.totalorder %s457, %s458
      %p470 = scmp.eq.s32.totalorder %s35, 2
      %p471 = por %p469, %p470
      %p473 = scmp.ne.s32.totalorder %s458, %s472
      %p474 = scmp.eq.s32.totalorder %s35, 0
      %p475 = por %p473, %p474
      %s477 = sadd.s32 %s476, 1
      %p480 = scmp.eq.s32.totalorder %s29, 2
      %p481 = scmp.ne.s32.totalorder %s476, %s478
      %p482 = scmp.eq.s32.totalorder %s29, 0
      %p483 = por %p481, %p482
      %p484 = scmp.ne.s32.totalorder %s476, %s478
      %p485 = scmp.eq.s32.totalorder %s34, 2
      %p486 = por %p484, %p485
      %p487 = scmp.ne.s32.totalorder %s478, %s479
      %p488 = scmp.eq.s32.totalorder %s34, 0
      %p489 = por %p487, %p488
      %p490 = scmp.ne.s32.totalorder %s478, %s479
      %p491 = scmp.eq.s32.totalorder %s35, 2
      %p492 = por %p490, %p491
      %p494 = scmp.ne.s32.totalorder %s479, %s493
      %p495 = scmp.eq.s32.totalorder %s35, 0
      %p496 = por %p494, %p495
      %s498 = sadd.s32 %s497, 1
      %p501 = scmp.eq.s32.totalorder %s29, 2
      %p502 = scmp.ne.s32.totalorder %s497, %s499
      %p503 = scmp.eq.s32.totalorder %s29, 0
      %p504 = por %p502, %p503
      %p505 = scmp.ne.s32.totalorder %s497, %s499
      %p506 = scmp.eq.s32.totalorder %s34, 2
      %p507 = por %p505, %p506
      %p508 = scmp.ne.s32.totalorder %s499, %s500
      %p509 = scmp.eq.s32.totalorder %s34, 0
      %p510 = por %p508, %p509
      %p511 = scmp.ne.s32.totalorder %s499, %s500
      %p512 = scmp.eq.s32.totalorder %s35, 2
      %p513 = por %p511, %p512
      %p515 = scmp.ne.s32.totalorder %s500, %s514
      %p516 = scmp.eq.s32.totalorder %s35, 0
      %p517 = por %p515, %p516
      %s519 = sadd.s32 %s518, 1
      %p522 = scmp.eq.s32.totalorder %s29, 2
      %p523 = scmp.ne.s32.totalorder %s518, %s520
      %p524 = scmp.eq.s32.totalorder %s29, 0
      %p525 = por %p523, %p524
      %p526 = scmp.ne.s32.totalorder %s518, %s520
      %p527 = scmp.eq.s32.totalorder %s34, 2
      %p528 = por %p526, %p527
      %p529 = scmp.ne.s32.totalorder %s520, %s521
      %p530 = scmp.eq.s32.totalorder %s34, 0
      %p531 = por %p529, %p530
      %p532 = scmp.ne.s32.totalorder %s520, %s521
      %p533 = scmp.eq.s32.totalorder %s35, 2
      %p534 = por %p532, %p533
      %p536 = scmp.ne.s32.totalorder %s521, %s535
      %p537 = scmp.eq.s32.totalorder %s35, 0
      %p538 = por %p536, %p537
      %p539 = scmp.le.s32.totalorder 1, %s29
      %p540 = scmp.lt.s32.totalorder %s29, 4
      %p541 = pnand %p539, %p540
      %p542 = pneg %p541
      // Predicated region
      $region9: #{gen_forward.1} parent=5 // pred_check
        _
      $region10: #{gen_forward.1} parent=5 // pred_check_branch
        %544 = sbr.rel (%p541) target = $region12
      $region11: #{gen_forward.1} parent=5 // pred_region
        %s545 = ssub.s32 %s29, 1
        // Predicated region
        $region13: #{gen_forward.1} parent=11 // pred_check
          %p546 = pneg %p50
        $region14: #{gen_forward.1} parent=11 // pred_check_branch
          %548 = sbr.rel (%p546) target = $region16
        $region15: #{gen_forward.1} parent=11 // pred_region
          %s550 = ssub.s32 16, 16
          %551 = vsyncadd [#allocation6], %s550
          %s553 = sshll.u32 %s0, 4
          %s554 = int_to_ptr.vmem [resolvable:$true] %s553
          %556 = dma.vmem_to_smem %s554, 16, [#allocation4], [#allocation6]
        $region16: #{gen_forward.1} parent=11 // pred_fallthru
          _
        // Predicated region
        $region17: #{gen_forward.1} parent=11 // pred_check
          %p557 = pneg %p71
        $region18: #{gen_forward.1} parent=11 // pred_check_branch
          %559 = sbr.rel (%p557) target = $region20
        $region19: #{gen_forward.1} parent=11 // pred_region
          _
        $region20: #{gen_forward.1} parent=11 // pred_fallthru
          _
        // Predicated region
        $region21: #{gen_forward.1} parent=11 // pred_check
          %p560 = pneg %p92
        $region22: #{gen_forward.1} parent=11 // pred_check_branch
          %562 = sbr.rel (%p560) target = $region24
        $region23: #{gen_forward.1} parent=11 // pred_region
          _
        $region24: #{gen_forward.1} parent=11 // pred_fallthru
          _
        // Predicated region
        $region25: #{gen_forward.1} parent=11 // pred_check
          %p563 = pneg %p113
        $region26: #{gen_forward.1} parent=11 // pred_check_branch
          %565 = sbr.rel (%p563) target = $region28
        $region27: #{gen_forward.1} parent=11 // pred_region
          _
        $region28: #{gen_forward.1} parent=11 // pred_fallthru
          _
        // Predicated region
        $region29: #{gen_forward.1} parent=11 // pred_check
          %p566 = pneg %p134
        $region30: #{gen_forward.1} parent=11 // pred_check_branch
          %568 = sbr.rel (%p566) target = $region32
        $region31: #{gen_forward.1} parent=11 // pred_region
          _
        $region32: #{gen_forward.1} parent=11 // pred_fallthru
          _
        // Predicated region
        $region33: #{gen_forward.1} parent=11 // pred_check
          %p569 = pneg %p155
        $region34: #{gen_forward.1} parent=11 // pred_check_branch
          %571 = sbr.rel (%p569) target = $region36
        $region35: #{gen_forward.1} parent=11 // pred_region
          _
        $region36: #{gen_forward.1} parent=11 // pred_fallthru
          _
        // Predicated region
        $region37: #{gen_forward.1} parent=11 // pred_check
          %p572 = pneg %p176
        $region38: #{gen_forward.1} parent=11 // pred_check_branch
          %574 = sbr.rel (%p572) target = $region40
        $region39: #{gen_forward.1} parent=11 // pred_region
          _
        $region40: #{gen_forward.1} parent=11 // pred_fallthru
          _
        // Predicated region
        $region41: #{gen_forward.1} parent=11 // pred_check
          %p575 = pneg %p197
        $region42: #{gen_forward.1} parent=11 // pred_check_branch
          %577 = sbr.rel (%p575) target = $region44
        $region43: #{gen_forward.1} parent=11 // pred_region
          _
        $region44: #{gen_forward.1} parent=11 // pred_fallthru
          _
        // Predicated region
        $region45: #{gen_forward.1} parent=11 // pred_check
          %p578 = pneg %p218
        $region46: #{gen_forward.1} parent=11 // pred_check_branch
          %580 = sbr.rel (%p578) target = $region48
        $region47: #{gen_forward.1} parent=11 // pred_region
          _
        $region48: #{gen_forward.1} parent=11 // pred_fallthru
          _
        // Predicated region
        $region49: #{gen_forward.1} parent=11 // pred_check
          %p581 = pneg %p447
        $region50: #{gen_forward.1} parent=11 // pred_check_branch
          %583 = sbr.rel (%p581) target = $region52
        $region51: #{gen_forward.1} parent=11 // pred_region
          _
        $region52: #{gen_forward.1} parent=11 // pred_fallthru
          _
        // Predicated region
        $region53: #{gen_forward.1} parent=11 // pred_check
          %p584 = pneg %p468
        $region54: #{gen_forward.1} parent=11 // pred_check_branch
          %586 = sbr.rel (%p584) target = $region56
        $region55: #{gen_forward.1} parent=11 // pred_region
          _
        $region56: #{gen_forward.1} parent=11 // pred_fallthru
          _
        // Predicated region
        $region57: #{gen_forward.1} parent=11 // pred_check
          %p587 = pneg %p489
        $region58: #{gen_forward.1} parent=11 // pred_check_branch
          %589 = sbr.rel (%p587) target = $region60
        $region59: #{gen_forward.1} parent=11 // pred_region
          _
        $region60: #{gen_forward.1} parent=11 // pred_fallthru
          _
        // Predicated region
        $region61: #{gen_forward.1} parent=11 // pred_check
          %p590 = pneg %p510
        $region62: #{gen_forward.1} parent=11 // pred_check_branch
          %592 = sbr.rel (%p590) target = $region64
        $region63: #{gen_forward.1} parent=11 // pred_region
          _
        $region64: #{gen_forward.1} parent=11 // pred_fallthru
          _
      $region12: #{gen_forward.1} parent=5 // pred_fallthru
        _
      %p593 = scmp.lt.s32.totalorder %s29, 3
      // Predicated region
      $region65: #{gen_forward.1} parent=5 // pred_check
        %p594 = pneg %p593
      $region66: #{gen_forward.1} parent=5 // pred_check_branch
        %596 = sbr.rel (%p594) target = $region68
      $region67: #{gen_forward.1} parent=5 // pred_region
        // Predicated region
        $region69: #{gen_forward.1} parent=67 // pred_check
          %p597 = pneg %p238
        $region70: #{gen_forward.1} parent=67 // pred_check_branch
          %599 = sbr.rel (%p597) target = $region72
        $region71: #{gen_forward.1} parent=67 // pred_region
          %p600 = scmp.lt.s32.totalorder %s29, 2
          %s601 = scalar_select %p600, %s29, 2
          %s602 = scalar_lea.vmem %s9, %s601
        $region72: #{gen_forward.1} parent=67 // pred_fallthru
          _
        // Predicated region
        $region73: #{gen_forward.1} parent=67 // pred_check
          %p603 = pneg %p264
        $region74: #{gen_forward.1} parent=67 // pred_check_branch
          %605 = sbr.rel (%p603) target = $region76
        $region75: #{gen_forward.1} parent=67 // pred_region
          %p606 = scmp.lt.s32.totalorder %s29, 2
          %s607 = scalar_select %p606, %s29, 2
          %s608 = scalar_lea.vmem %s10, %s607
        $region76: #{gen_forward.1} parent=67 // pred_fallthru
          _
        // Predicated region
        $region77: #{gen_forward.1} parent=67 // pred_check
          %p609 = pneg %p290
        $region78: #{gen_forward.1} parent=67 // pred_check_branch
          %611 = sbr.rel (%p609) target = $region80
        $region79: #{gen_forward.1} parent=67 // pred_region
          %p612 = scmp.lt.s32.totalorder %s29, 2
          %s613 = scalar_select %p612, %s29, 2
          %s614 = smul.addr %s613, 4
          %s615 = smul.addr %s614, 8
          %s616 = scalar_lea.vmem %s11, %s615
        $region80: #{gen_forward.1} parent=67 // pred_fallthru
          _
        // Predicated region
        $region81: #{gen_forward.1} parent=67 // pred_check
          %p617 = pneg %p316
        $region82: #{gen_forward.1} parent=67 // pred_check_branch
          %619 = sbr.rel (%p617) target = $region84
        $region83: #{gen_forward.1} parent=67 // pred_region
          %p620 = scmp.lt.s32.totalorder %s29, 2
          %s621 = scalar_select %p620, %s29, 2
          %s622 = scalar_lea.vmem %s12, %s621
        $region84: #{gen_forward.1} parent=67 // pred_fallthru
          _
        // Predicated region
        $region85: #{gen_forward.1} parent=67 // pred_check
          %p623 = pneg %p342
        $region86: #{gen_forward.1} parent=67 // pred_check_branch
          %625 = sbr.rel (%p623) target = $region88
        $region87: #{gen_forward.1} parent=67 // pred_region
          %p626 = scmp.lt.s32.totalorder %s29, 2
          %s627 = scalar_select %p626, %s29, 2
          %s628 = scalar_lea.vmem %s13, %s627
        $region88: #{gen_forward.1} parent=67 // pred_fallthru
          _
        // Predicated region
        $region89: #{gen_forward.1} parent=67 // pred_check
          %p629 = pneg %p368
        $region90: #{gen_forward.1} parent=67 // pred_check_branch
          %631 = sbr.rel (%p629) target = $region92
        $region91: #{gen_forward.1} parent=67 // pred_region
          %p632 = scmp.lt.s32.totalorder %s29, 2
          %s633 = scalar_select %p632, %s29, 2
          %s634 = scalar_lea.vmem %s14, %s633
        $region92: #{gen_forward.1} parent=67 // pred_fallthru
          _
        // Predicated region
        $region93: #{gen_forward.1} parent=67 // pred_check
          %p635 = pneg %p394
        $region94: #{gen_forward.1} parent=67 // pred_check_branch
          %637 = sbr.rel (%p635) target = $region96
        $region95: #{gen_forward.1} parent=67 // pred_region
          %p638 = scmp.lt.s32.totalorder %s29, 2
          %s639 = scalar_select %p638, %s29, 2
          %s640 = smul.addr %s639, 8
          %s641 = smul.addr %s640, 8
          %s642 = scalar_lea.vmem %s15, %s641
        $region96: #{gen_forward.1} parent=67 // pred_fallthru
          _
        // Predicated region
        $region97: #{gen_forward.1} parent=67 // pred_check
          %p643 = pneg %p420
        $region98: #{gen_forward.1} parent=67 // pred_check_branch
          %645 = sbr.rel (%p643) target = $region100
        $region99: #{gen_forward.1} parent=67 // pred_region
          %p646 = scmp.lt.s32.totalorder %s29, 2
          %s647 = scalar_select %p646, %s29, 2
          %s648 = scalar_lea.vmem %s16, %s647
        $region100: #{gen_forward.1} parent=67 // pred_fallthru
          _
      $region68: #{gen_forward.1} parent=5 // pred_fallthru
        _
      %p649 = scmp.le.s32.totalorder 1, %s29
      %p650 = scmp.lt.s32.totalorder %s29, 4
      %p651 = pnand %p649, %p650
      %p652 = pneg %p651
      // Predicated region
      $region101: #{gen_forward.1} parent=5 // pred_check
        _
      $region102: #{gen_forward.1} parent=5 // pred_check_branch
        %654 = sbr.rel (%p651) target = $region104
      $region103: #{gen_forward.1} parent=5 // pred_region
        %s655 = ssub.s32 %s29, 1
        // Predicated region
        $region105: #{gen_forward.1} parent=103 // pred_check
          %p656 = pneg %p50
        $region106: #{gen_forward.1} parent=103 // pred_check_branch
          %658 = sbr.rel (%p656) target = $region108
        $region107: #{gen_forward.1} parent=103 // pred_region
          %659 = dma.done [#allocation6], 16
        $region108: #{gen_forward.1} parent=103 // pred_fallthru
          _
        %660 = sfence
        %p661 = pneg %p50
        %p662 = pneg %p47
        %p663 = pneg %p71
        %p664 = pneg %p68
        %p665 = pneg %p92
        %p666 = pneg %p89
        %p667 = pneg %p113
        %p668 = pneg %p110
        %p669 = pneg %p134
        %p670 = pneg %p131
        %p671 = pneg %p155
        %p672 = pneg %p152
        %p673 = pneg %p176
        %p674 = pneg %p173
        %p675 = pneg %p197
        %p676 = pneg %p194
        %p677 = pneg %p218
        %p678 = pneg %p215
        %p679 = scmp.lt.s32.totalorder %s34, 2
        %s680 = scalar_select %p679, %s34, 2
        %s681 = scalar_lea.vmem %s9, %s680
        %p682 = pneg %p244
        %p683 = pneg %p241
        %p684 = scmp.lt.s32.totalorder %s34, 2
        %s685 = scalar_select %p684, %s34, 2
        %s686 = scalar_lea.vmem %s10, %s685
        %p687 = pneg %p270
        %p688 = pneg %p267
        %p689 = scmp.lt.s32.totalorder %s34, 2
        %s690 = scalar_select %p689, %s34, 2
        %s691 = smul.addr %s690, 4
        %s692 = smul.addr %s691, 8
        %s693 = scalar_lea.vmem %s11, %s692
        %p694 = pneg %p296
        %p695 = pneg %p293
        %p696 = scmp.lt.s32.totalorder %s34, 2
        %s697 = scalar_select %p696, %s34, 2
        %s698 = scalar_lea.vmem %s12, %s697
        %p699 = pneg %p322
        %p700 = pneg %p319
        %p701 = scmp.lt.s32.totalorder %s34, 2
        %s702 = scalar_select %p701, %s34, 2
        %s703 = scalar_lea.vmem %s13, %s702
        %p704 = pneg %p348
        %p705 = pneg %p345
        %p706 = scmp.lt.s32.totalorder %s34, 2
        %s707 = scalar_select %p706, %s34, 2
        %s708 = scalar_lea.vmem %s14, %s707
        %p709 = pneg %p374
        %p710 = pneg %p371
        %p711 = scmp.lt.s32.totalorder %s34, 2
        %s712 = scalar_select %p711, %s34, 2
        %s713 = smul.addr %s712, 8
        %s714 = smul.addr %s713, 8
        %s715 = scalar_lea.vmem %s15, %s714
        %p716 = pneg %p400
        %p717 = pneg %p397
        %p718 = scmp.lt.s32.totalorder %s34, 2
        %s719 = scalar_select %p718, %s34, 2
        %s720 = scalar_lea.vmem %s16, %s719
        %p721 = pneg %p426
        %p722 = pneg %p423
        %p723 = pneg %p447
        %p724 = pneg %p444
        %p725 = pneg %p468
        %p726 = pneg %p465
        %p727 = pneg %p489
        %p728 = pneg %p486
        %p729 = pneg %p510
        %p730 = pneg %p507
        %p731 = pneg %p531
        %p732 = pneg %p528
        %p733 = scmp.lt.s32.totalorder %s34, 2
        %s734 = scalar_select %p733, %s34, 2
        %s735 = scalar_lea.vmem %s9, %s734
        %p736 = scmp.lt.s32.totalorder %s34, 2
        %s737 = scalar_select %p736, %s34, 2
        %s738 = scalar_lea.vmem %s10, %s737
        %p739 = scmp.lt.s32.totalorder %s34, 2
        %s740 = scalar_select %p739, %s34, 2
        %s741 = smul.addr %s740, 4
        %s742 = smul.addr %s741, 8
        %s743 = scalar_lea.vmem %s11, %s742
        %p744 = scmp.lt.s32.totalorder %s34, 2
        %s745 = scalar_select %p744, %s34, 2
        %s746 = scalar_lea.vmem %s12, %s745
        %p747 = scmp.lt.s32.totalorder %s34, 2
        %s748 = scalar_select %p747, %s34, 2
        %s749 = scalar_lea.vmem %s13, %s748
        %p750 = scmp.lt.s32.totalorder %s34, 2
        %s751 = scalar_select %p750, %s34, 2
        %s752 = scalar_lea.vmem %s14, %s751
        %p753 = scmp.lt.s32.totalorder %s34, 2
        %s754 = scalar_select %p753, %s34, 2
        %s755 = smul.addr %s754, 8
        %s756 = smul.addr %s755, 8
        %s757 = scalar_lea.vmem %s15, %s756
        %p758 = scmp.lt.s32.totalorder %s34, 2
        %s759 = scalar_select %p758, %s34, 2
        %s760 = scalar_lea.vmem %s16, %s759
        %p761 = scmp.eq.s32.totalorder %s34, 0
        // Predicated region
        $region109: #{gen_forward.1} parent=103 // pred_check
          %p762 = pneg %p761
        $region110: #{gen_forward.1} parent=103 // pred_check_branch
          %764 = sbr.rel (%p762) target = $region112
        $region111: #{gen_forward.1} parent=103 // pred_region
          %v765 = vld [vmem:[%s1] sm:$0xff]
          %v766 = vld [vmem:[%s1 + $0x8] sm:$0xff]
          %v767 = vld [vmem:[%s5] sm:$0xff]
          %v768 = vld [vmem:[%s6] sm:$0x1]
          %v770 = vlaneseq
          %v771 = vshrl.u32 %v770, 7
          %v772 = vsub.s32 0, %v771
          %v773 = vrot.slane %v768, %v772
          %vm775 = vcmask 64512
          %v777 = vsel %vm775, %v765, 0
          %v780 = vsel %vm775, %v766, 0
          %782 = vmatprep.subr.mxu0 0.0
          %783 = vmatpush1.msra.mxu0 0.0
          %784 = vmatprep.subr.mxu0 0.0
          %785 = vmatpush1.msra.mxu0 0.0
          %786 = vmatprep.subr.mxu0 0.0
          %787 = vmatpush1.msra.mxu0 0.0
          %788 = vmatprep.subr.mxu0 0.0
          %789 = vmatpush1.msra.mxu0 0.0
          %790 = vmatprep.subr.mxu0 0.0
          %791 = vmatpush1.msra.mxu0 0.0
          %792 = vmatprep.subr.mxu0 0.0
          %793 = vmatpush1.msra.mxu0 0.0
          %794 = vmatprep.subr.mxu0 0.0
          %795 = vmatpush1.msra.mxu0 0.0
          %796 = vmatprep.subr.mxu0 0.0
          %797 = vmatpush1.msra.mxu0 0.0
          %798 = vmatprep.subr.mxu0 0.0
          %799 = vmatpush1.msra.mxu0 0.0
          %800 = vmatprep.subr.mxu0 0.0
          %801 = vmatpush1.msra.mxu0 0.0
          %802 = vmatprep.subr.mxu0 0.0
          %803 = vmatpush1.msra.mxu0 0.0
          %804 = vmatprep.subr.mxu0 0.0
          %805 = vmatpush1.msra.mxu0 0.0
          %806 = vmatprep.subr.mxu0 0.0
          %807 = vmatpush1.msra.mxu0 0.0
          %808 = vmatprep.subr.mxu0 0.0
          %809 = vmatpush1.msra.mxu0 0.0
          %810 = vmatprep.subr.mxu0 0.0
          %811 = vmatpush1.msra.mxu0 0.0
          %812 = vmatprep.subr.mxu0 0.0
          %813 = vmatpush1.msra.mxu0 %v767
          %814 = vmatprep.subr.mxu0 0.0
          %815 = vmatpush2.msra.mxu0 0.0
          %816 = vmatprep.subr.mxu0 0.0
          %817 = vmatpush2.msra.mxu0 0.0
          %818 = vmatprep.subr.mxu0 0.0
          %819 = vmatpush2.msra.mxu0 0.0
          %820 = vmatprep.subr.mxu0 0.0
          %821 = vmatpush2.msra.mxu0 0.0
          %822 = vmatprep.subr.mxu0 0.0
          %823 = vmatpush2.msra.mxu0 0.0
          %824 = vmatprep.subr.mxu0 0.0
          %825 = vmatpush2.msra.mxu0 0.0
          %826 = vmatprep.subr.mxu0 0.0
          %827 = vmatpush2.msra.mxu0 0.0
          %828 = vmatprep.subr.mxu0 0.0
          %829 = vmatpush2.msra.mxu0 0.0
          %830 = vmatprep.subr.mxu0 0.0
          %831 = vmatpush2.msra.mxu0 0.0
          %832 = vmatprep.subr.mxu0 0.0
          %833 = vmatpush2.msra.mxu0 0.0
          %834 = vmatprep.subr.mxu0 0.0
          %835 = vmatpush2.msra.mxu0 0.0
          %836 = vmatprep.subr.mxu0 0.0
          %837 = vmatpush2.msra.mxu0 0.0
          %838 = vmatprep.subr.mxu0 0.0
          %839 = vmatpush2.msra.mxu0 0.0
          %840 = vmatprep.subr.mxu0 0.0
          %841 = vmatpush2.msra.mxu0 0.0
          %842 = vmatprep.subr.mxu0 0.0
          %843 = vmatpush2.msra.mxu0 0.0
          %844 = vmatprep.subr.mxu0 0.0
          %845 = vmatpush2.msra.mxu0 0.0
          %846 = vmatprep.mubr.f32.mxu0 0.0
          %847 = vmatmul.mubr.f32.gmra.mxu0 %v777
          %v848 = vpop.f32.mrf.mxu0
          %v849 = vadd.f32 %v773, %v848
          %v850 = vpop.f32.mrf.mxu0
          %851 = vmatprep.mubr.f32.mxu0 0.0
          %852 = vmatmul.mubr.f32.gmra.mxu0 %v780
          %v853 = vpop.f32.mrf.mxu0
          %v854 = vadd.f32 %v773, %v853
          %v855 = vpop.f32.mrf.mxu0
          %856 = vdwg.mxu0
          %vm857 = vcmask 261120
          %858 = vst.msk [vmem:[#allocation2] sm:$0xff] %vm857, %v849
          %859 = vst.msk [vmem:[#allocation2 + $0x8] sm:$0xff] %vm857, %v854
          %v860 = vld [vmem:[%s2] sm:$0xff]
          %v861 = vld [vmem:[%s2 + $0x8] sm:$0xff]
          %v862 = vld [vmem:[%s2 + $0x10] sm:$0xff]
          %v863 = vld [vmem:[%s2 + $0x18] sm:$0xff]
          %v864 = vld [vmem:[%s2 + $0x20] sm:$0xff]
          %v865 = vld [vmem:[%s2 + $0x28] sm:$0xff]
          %v866 = vld [vmem:[%s7] sm:$0xff]
          %v867 = vld [vmem:[%s8] sm:$0x1]
          %v869 = vlaneseq
          %v870 = vshrl.u32 %v869, 7
          %v871 = vsub.s32 0, %v870
          %v872 = vrot.slane %v867, %v871
          %v875 = vsel %vm775, %v860, 0
          %v878 = vsel %vm775, %v861, 0
          %v881 = vsel %vm775, %v862, 0
          %v884 = vsel %vm775, %v863, 0
          %v887 = vsel %vm775, %v864, 0
          %v890 = vsel %vm775, %v865, 0
          %892 = vmatprep.subr.mxu0 0.0
          %893 = vmatpush1.msra.mxu0 0.0
          %894 = vmatprep.subr.mxu0 0.0
          %895 = vmatpush1.msra.mxu0 0.0
          %896 = vmatprep.subr.mxu0 0.0
          %897 = vmatpush1.msra.mxu0 0.0
          %898 = vmatprep.subr.mxu0 0.0
          %899 = vmatpush1.msra.mxu0 0.0
          %900 = vmatprep.subr.mxu0 0.0
          %901 = vmatpush1.msra.mxu0 0.0
          %902 = vmatprep.subr.mxu0 0.0
          %903 = vmatpush1.msra.mxu0 0.0
          %904 = vmatprep.subr.mxu0 0.0
          %905 = vmatpush1.msra.mxu0 0.0
          %906 = vmatprep.subr.mxu0 0.0
          %907 = vmatpush1.msra.mxu0 0.0
          %908 = vmatprep.subr.mxu0 0.0
          %909 = vmatpush1.msra.mxu0 0.0
          %910 = vmatprep.subr.mxu0 0.0
          %911 = vmatpush1.msra.mxu0 0.0
          %912 = vmatprep.subr.mxu0 0.0
          %913 = vmatpush1.msra.mxu0 0.0
          %914 = vmatprep.subr.mxu0 0.0
          %915 = vmatpush1.msra.mxu0 0.0
          %916 = vmatprep.subr.mxu0 0.0
          %917 = vmatpush1.msra.mxu0 0.0
          %918 = vmatprep.subr.mxu0 0.0
          %919 = vmatpush1.msra.mxu0 0.0
          %920 = vmatprep.subr.mxu0 0.0
          %921 = vmatpush1.msra.mxu0 0.0
          %922 = vmatprep.subr.mxu0 0.0
          %923 = vmatpush1.msra.mxu0 %v866
          %924 = vmatprep.subr.mxu0 0.0
          %925 = vmatpush2.msra.mxu0 0.0
          %926 = vmatprep.subr.mxu0 0.0
          %927 = vmatpush2.msra.mxu0 0.0
          %928 = vmatprep.subr.mxu0 0.0
          %929 = vmatpush2.msra.mxu0 0.0
          %930 = vmatprep.subr.mxu0 0.0
          %931 = vmatpush2.msra.mxu0 0.0
          %932 = vmatprep.subr.mxu0 0.0
          %933 = vmatpush2.msra.mxu0 0.0
          %934 = vmatprep.subr.mxu0 0.0
          %935 = vmatpush2.msra.mxu0 0.0
          %936 = vmatprep.subr.mxu0 0.0
          %937 = vmatpush2.msra.mxu0 0.0
          %938 = vmatprep.subr.mxu0 0.0
          %939 = vmatpush2.msra.mxu0 0.0
          %940 = vmatprep.subr.mxu0 0.0
          %941 = vmatpush2.msra.mxu0 0.0
          %942 = vmatprep.subr.mxu0 0.0
          %943 = vmatpush2.msra.mxu0 0.0
          %944 = vmatprep.subr.mxu0 0.0
          %945 = vmatpush2.msra.mxu0 0.0
          %946 = vmatprep.subr.mxu0 0.0
          %947 = vmatpush2.msra.mxu0 0.0
          %948 = vmatprep.subr.mxu0 0.0
          %949 = vmatpush2.msra.mxu0 0.0
          %950 = vmatprep.subr.mxu0 0.0
          %951 = vmatpush2.msra.mxu0 0.0
          %952 = vmatprep.subr.mxu0 0.0
          %953 = vmatpush2.msra.mxu0 0.0
          %954 = vmatprep.subr.mxu0 0.0
          %955 = vmatpush2.msra.mxu0 0.0
          %956 = vmatprep.mubr.f32.mxu0 0.0
          %957 = vmatmul.mubr.f32.gmra.mxu0 %v875
          %v958 = vpop.f32.mrf.mxu0
          %v959 = vadd.f32 %v872, %v958
          %v960 = vpop.f32.mrf.mxu0
          %961 = vmatprep.mubr.f32.mxu0 0.0
          %962 = vmatmul.mubr.f32.gmra.mxu0 %v878
          %v963 = vpop.f32.mrf.mxu0
          %v964 = vadd.f32 %v872, %v963
          %v965 = vpop.f32.mrf.mxu0
          %966 = vmatprep.mubr.f32.mxu0 0.0
          %967 = vmatmul.mubr.f32.gmra.mxu0 %v881
          %v968 = vpop.f32.mrf.mxu0
          %v969 = vadd.f32 %v872, %v968
          %v970 = vpop.f32.mrf.mxu0
          %971 = vmatprep.mubr.f32.mxu0 0.0
          %972 = vmatmul.mubr.f32.gmra.mxu0 %v884
          %v973 = vpop.f32.mrf.mxu0
          %v974 = vadd.f32 %v872, %v973
          %v975 = vpop.f32.mrf.mxu0
          %976 = vmatprep.mubr.f32.mxu0 0.0
          %977 = vmatmul.mubr.f32.gmra.mxu0 %v887
          %v978 = vpop.f32.mrf.mxu0
          %v979 = vadd.f32 %v872, %v978
          %v980 = vpop.f32.mrf.mxu0
          %981 = vmatprep.mubr.f32.mxu0 0.0
          %982 = vmatmul.mubr.f32.gmra.mxu0 %v890
          %v983 = vpop.f32.mrf.mxu0
          %v984 = vadd.f32 %v872, %v983
          %v985 = vpop.f32.mrf.mxu0
          %986 = vdwg.mxu0
          %987 = vst.msk [vmem:[#allocation3] sm:$0xff] %vm857, %v959
          %988 = vst.msk [vmem:[#allocation3 + $0x8] sm:$0xff] %vm857, %v964
          %989 = vst.msk [vmem:[#allocation3 + $0x10] sm:$0xff] %vm857, %v969
          %990 = vst.msk [vmem:[#allocation3 + $0x18] sm:$0xff] %vm857, %v974
          %991 = vst.msk [vmem:[#allocation3 + $0x20] sm:$0xff] %vm857, %v979
          %992 = vst.msk [vmem:[#allocation3 + $0x28] sm:$0xff] %vm857, %v984
        $region112: #{gen_forward.1} parent=103 // pred_fallthru
          _
        %v993 = vlaneseq
        %v994 = vand.u32 %v993, 127
        %v995 = vld [vmem:[%s3] sm:$0xff]
        %v996 = vld [vmem:[%s3 + $0x8] sm:$0xff]
        %v997 = vld [vmem:[%s3 + $0x10] sm:$0xff]
        %v998 = vld [vmem:[%s3 + $0x18] sm:$0xff]
        %v999 = vld [vmem:[%s3 + $0x20] sm:$0xff]
        %v1000 = vld [vmem:[%s3 + $0x28] sm:$0xff]
        %1001 = vset.pattern.permute.xlu0 0
        %1002 = vperm.xlu0 %1001, %v995
        %v1003 = vpop.permute.xlu0 %1002
        %1004 = vset.pattern.permute.xlu0 0
        %1005 = vperm.xlu0 %1004, %v996
        %v1006 = vpop.permute.xlu0 %1005
        %1007 = vset.pattern.permute.xlu0 0
        %1008 = vperm.xlu0 %1007, %v997
        %v1009 = vpop.permute.xlu0 %1008
        %1010 = vset.pattern.permute.xlu0 0
        %1011 = vperm.xlu0 %1010, %v998
        %v1012 = vpop.permute.xlu0 %1011
        %1013 = vset.pattern.permute.xlu0 0
        %1014 = vperm.xlu0 %1013, %v999
        %v1015 = vpop.permute.xlu0 %1014
        %1016 = vset.pattern.permute.xlu0 0
        %1017 = vperm.xlu0 %1016, %v1000
        %v1018 = vpop.permute.xlu0 %1017
        %vm1019 = vcmp.eq.s32.totalorder %v994, %v1003
        %vm1020 = vcmp.eq.s32.totalorder %v994, %v1006
        %vm1021 = vcmp.eq.s32.totalorder %v994, %v1009
        %vm1022 = vcmp.eq.s32.totalorder %v994, %v1012
        %vm1023 = vcmp.eq.s32.totalorder %v994, %v1015
        %vm1024 = vcmp.eq.s32.totalorder %v994, %v1018
        %v1025 = vsel %vm1019, 1, 0
        %v1026 = vsel %vm1020, 1, 0
        %v1027 = vsel %vm1021, 1, 0
        %v1028 = vsel %vm1022, 1, 0
        %v1029 = vsel %vm1023, 1, 0
        %v1030 = vsel %vm1024, 1, 0
        %v1031 = vcvt.s32.f32 %v1025
        %v1032 = vcvt.s32.f32 %v1026
        %v1033 = vcvt.s32.f32 %v1027
        %v1034 = vcvt.s32.f32 %v1028
        %v1035 = vcvt.s32.f32 %v1029
        %v1036 = vcvt.s32.f32 %v1030
        %v1037 = vlaneseq
        %v1038 = vshrl.u32 %v1037, 7
        %v1039 = vadd.s32 %v1038, 8
        %v1040 = vld [vmem:[%s4] sm:$0x1]
        %v1041 = vlaneseq
        %v1042 = vshrl.u32 %v1041, 7
        %v1043 = vsub.s32 0, %v1042
        %v1044 = vrot.slane %v1040, %v1043
        %vm1045 = vcmp.eq.s32.totalorder %v1038, %v1044
        %vm1046 = vcmp.eq.s32.totalorder %v1039, %v1044
        %v1047 = vsel %vm1045, 1, 0
        %v1048 = vsel %vm1046, 1, 0
        %v1049 = vcvt.s32.f32 %v1047
        %v1050 = vcvt.s32.f32 %v1048
        %v1051 = vld [vmem:[#allocation2] sm:$0xff]
        %v1052 = vld [vmem:[#allocation2 + $0x8] sm:$0xff]
        %v1053 = vld [vmem:[%s735] sm:$0x1]
        %v1054 = vld [vmem:[%s738] sm:$0x1]
        %vm1055 = vcmask 261120
        %v1056 = vsel %vm1055, %v1051, 0.0
        %1057 = vadd.xlane.f32.xlu0 %v1056
        %v1058 = vpop.xlane.xlu0 %1057
        %v1059 = vsel %vm1055, %v1052, 0.0
        %1060 = vadd.xlane.f32.xlu0 %v1059
        %v1061 = vpop.xlane.xlu0 %1060
        %v1062 = vrcp.pop 32.0
        %v1063 = vmul.f32 %v1058, %v1062
        %v1064 = vmul.f32 %v1061, %v1062
        %v1065 = vsub.f32 %v1051, %v1063
        %v1066 = vsub.f32 %v1052, %v1064
        %v1067 = vmul.f32 %v1065, %v1065
        %v1068 = vmul.f32 %v1066, %v1066
        %v1069 = vsel %vm1055, %v1067, 0.0
        %1070 = vadd.xlane.f32.xlu0 %v1069
        %v1071 = vpop.xlane.xlu0 %1070
        %v1072 = vsel %vm1055, %v1068, 0.0
        %1073 = vadd.xlane.f32.xlu0 %v1072
        %v1074 = vpop.xlane.xlu0 %1073
        %v1075 = vmul.f32 %v1071, %v1062
        %v1076 = vmul.f32 %v1074, %v1062
        %v1077 = vadd.f32 %v1075, 1e-05
        %v1078 = vadd.f32 %v1076, 1e-05
        %v1079 = vrsqrt.pop %v1077
        %v1080 = vrsqrt.pop %v1078
        %v1081 = vmul.f32 %v1065, %v1079
        %v1082 = vmul.f32 %v1066, %v1080
        %v1084 = vlaneseq
        %v1085 = vshrl.u32 %v1084, 7
        %v1086 = vsub.s32 0, %v1085
        %v1087 = vrot.slane %v1053, %v1086
        %v1089 = vmul.f32 %v1081, %v1087
        %v1090 = vmul.f32 %v1082, %v1087
        %v1092 = vlaneseq
        %v1093 = vshrl.u32 %v1092, 7
        %v1094 = vsub.s32 0, %v1093
        %v1095 = vrot.slane %v1054, %v1094
        %v1097 = vadd.f32 %v1089, %v1095
        %v1098 = vadd.f32 %v1090, %v1095
        %v1099 = vmax.f32 %v1097, 0.0
        %v1100 = vmax.f32 %v1098, 0.0
        %s1101 = scalar_select %p761, 1, 0
        %s1102 = scvt.s32.f32 %s1101
        %v1103 = vstv %s1102
        %v1104 = vmul.f32 %v1103, %v1051
        %v1105 = vmul.f32 %v1103, %v1052
        %s1106 = ssub.f32 1.0, %s1102
        %v1107 = vstv %s1106
        %v1108 = vmul.f32 %v1107, %v1099
        %v1109 = vmul.f32 %v1107, %v1100
        %v1110 = vadd.f32 %v1104, %v1108
        %v1111 = vadd.f32 %v1105, %v1109
        %s1112 = sld [smem:[#allocation4 + %s34]]
        %v1113 = vld [vmem:[#allocation3] sm:$0xff]
        %v1114 = vld [vmem:[#allocation3 + $0x8] sm:$0xff]
        %v1115 = vld [vmem:[#allocation3 + $0x10] sm:$0xff]
        %v1116 = vld [vmem:[#allocation3 + $0x18] sm:$0xff]
        %v1117 = vld [vmem:[#allocation3 + $0x20] sm:$0xff]
        %v1118 = vld [vmem:[#allocation3 + $0x28] sm:$0xff]
        %vm1119 = vcmask 130048
        %v1121 = vsel %vm1119, %v1031, 0
        %v1124 = vsel %vm1119, %v1032, 0
        %v1127 = vsel %vm1119, %v1033, 0
        %v1130 = vsel %vm1119, %v1034, 0
        %v1133 = vsel %vm1119, %v1035, 0
        %v1136 = vsel %vm1119, %v1036, 0
        %1138 = vmatprep.subr.mxu0 0.0
        %1139 = vmatpush1.msra.mxu0 0.0
        %1140 = vmatprep.subr.mxu0 0.0
        %1141 = vmatpush1.msra.mxu0 0.0
        %1142 = vmatprep.subr.mxu0 0.0
        %1143 = vmatpush1.msra.mxu0 0.0
        %1144 = vmatprep.subr.mxu0 0.0
        %1145 = vmatpush1.msra.mxu0 0.0
        %1146 = vmatprep.subr.mxu0 0.0
        %1147 = vmatpush1.msra.mxu0 0.0
        %1148 = vmatprep.subr.mxu0 0.0
        %1149 = vmatpush1.msra.mxu0 0.0
        %1150 = vmatprep.subr.mxu0 0.0
        %1151 = vmatpush1.msra.mxu0 0.0
        %1152 = vmatprep.subr.mxu0 0.0
        %1153 = vmatpush1.msra.mxu0 0.0
        %1154 = vmatprep.subr.mxu0 0.0
        %1155 = vmatpush1.msra.mxu0 0.0
        %1156 = vmatprep.subr.mxu0 0.0
        %1157 = vmatpush1.msra.mxu0 0.0
        %1158 = vmatprep.subr.mxu0 0.0
        %1159 = vmatpush1.msra.mxu0 0.0
        %1160 = vmatprep.subr.mxu0 0.0
        %1161 = vmatpush1.msra.mxu0 0.0
        %1162 = vmatprep.subr.mxu0 0.0
        %1163 = vmatpush1.msra.mxu0 0.0
        %1164 = vmatprep.subr.mxu0 0.0
        %1165 = vmatpush1.msra.mxu0 0.0
        %1166 = vmatprep.subr.mxu0 0.0
        %1167 = vmatpush1.msra.mxu0 %v1111
        %1168 = vmatprep.subr.mxu0 0.0
        %1169 = vmatpush1.msra.mxu0 %v1110
        %1170 = vmatprep.subr.mxu0 0.0
        %1171 = vmatpush2.msra.mxu0 0.0
        %1172 = vmatprep.subr.mxu0 0.0
        %1173 = vmatpush2.msra.mxu0 0.0
        %1174 = vmatprep.subr.mxu0 0.0
        %1175 = vmatpush2.msra.mxu0 0.0
        %1176 = vmatprep.subr.mxu0 0.0
        %1177 = vmatpush2.msra.mxu0 0.0
        %1178 = vmatprep.subr.mxu0 0.0
        %1179 = vmatpush2.msra.mxu0 0.0
        %1180 = vmatprep.subr.mxu0 0.0
        %1181 = vmatpush2.msra.mxu0 0.0
        %1182 = vmatprep.subr.mxu0 0.0
        %1183 = vmatpush2.msra.mxu0 0.0
        %1184 = vmatprep.subr.mxu0 0.0
        %1185 = vmatpush2.msra.mxu0 0.0
        %1186 = vmatprep.subr.mxu0 0.0
        %1187 = vmatpush2.msra.mxu0 0.0
        %1188 = vmatprep.subr.mxu0 0.0
        %1189 = vmatpush2.msra.mxu0 0.0
        %1190 = vmatprep.subr.mxu0 0.0
        %1191 = vmatpush2.msra.mxu0 0.0
        %1192 = vmatprep.subr.mxu0 0.0
        %1193 = vmatpush2.msra.mxu0 0.0
        %1194 = vmatprep.subr.mxu0 0.0
        %1195 = vmatpush2.msra.mxu0 0.0
        %1196 = vmatprep.subr.mxu0 0.0
        %1197 = vmatpush2.msra.mxu0 0.0
        %1198 = vmatprep.subr.mxu0 0.0
        %1199 = vmatpush2.msra.mxu0 0.0
        %1200 = vmatprep.subr.mxu0 0.0
        %1201 = vmatpush2.msra.mxu0 0.0
        %1202 = vmatprep.mubr.f32.mxu0 0.0
        %1203 = vmatmul.mubr.f32.gmra.mxu0 %v1121
        %v1204 = vpop.f32.mrf.mxu0
        %v1205 = vadd.f32 %v1113, %v1204
        %v1206 = vpop.f32.mrf.mxu0
        %1207 = vmatprep.mubr.f32.mxu0 0.0
        %1208 = vmatmul.mubr.f32.gmra.mxu0 %v1124
        %v1209 = vpop.f32.mrf.mxu0
        %v1210 = vadd.f32 %v1114, %v1209
        %v1211 = vpop.f32.mrf.mxu0
        %1212 = vmatprep.mubr.f32.mxu0 0.0
        %1213 = vmatmul.mubr.f32.gmra.mxu0 %v1127
        %v1214 = vpop.f32.mrf.mxu0
        %v1215 = vadd.f32 %v1115, %v1214
        %v1216 = vpop.f32.mrf.mxu0
        %1217 = vmatprep.mubr.f32.mxu0 0.0
        %1218 = vmatmul.mubr.f32.gmra.mxu0 %v1130
        %v1219 = vpop.f32.mrf.mxu0
        %v1220 = vadd.f32 %v1116, %v1219
        %v1221 = vpop.f32.mrf.mxu0
        %1222 = vmatprep.mubr.f32.mxu0 0.0
        %1223 = vmatmul.mubr.f32.gmra.mxu0 %v1133
        %v1224 = vpop.f32.mrf.mxu0
        %v1225 = vadd.f32 %v1117, %v1224
        %v1226 = vpop.f32.mrf.mxu0
        %1227 = vmatprep.mubr.f32.mxu0 0.0
        %1228 = vmatmul.mubr.f32.gmra.mxu0 %v1136
        %v1229 = vpop.f32.mrf.mxu0
        %v1230 = vadd.f32 %v1118, %v1229
        %v1231 = vpop.f32.mrf.mxu0
        %1232 = vdwg.mxu0
        %v1233 = vmax.f32 %v1205, 0.0
        %v1234 = vmax.f32 %v1210, 0.0
        %v1235 = vmax.f32 %v1215, 0.0
        %v1236 = vmax.f32 %v1220, 0.0
        %v1237 = vmax.f32 %v1225, 0.0
        %v1238 = vmax.f32 %v1230, 0.0
        %v1239 = vadd.f32 %v1233, 1e-07
        %v1240 = vadd.f32 %v1234, 1e-07
        %v1241 = vadd.f32 %v1235, 1e-07
        %v1242 = vadd.f32 %v1236, 1e-07
        %v1243 = vadd.f32 %v1237, 1e-07
        %v1244 = vadd.f32 %v1238, 1e-07
        %v1245 = vsel %vm1055, %v1239, -inf
        %v1246 = vsel %vm1055, %v1240, -inf
        %v1247 = vsel %vm1055, %v1241, -inf
        %v1248 = vsel %vm1055, %v1242, -inf
        %v1249 = vsel %vm1055, %v1243, -inf
        %v1250 = vmax.f32 %v1245, %v1249
        %v1251 = vsel %vm1055, %v1244, -inf
        %v1252 = vmax.f32 %v1246, %v1251
        %v1253 = vmax.f32 %v1250, %v1252
        %v1254 = vmax.f32 %v1247, %v1248
        %v1255 = vmax.f32 %v1253, %v1254
        %v1256 = vrot.slane %v1255, 4
        %v1257 = vmax.f32 %v1255, %v1256
        %v1258 = vrot.slane %v1257, 2
        %v1259 = vmax.f32 %v1257, %v1258
        %v1260 = vrot.slane %v1259, 1
        %v1261 = vmax.f32 %v1259, %v1260
        %v1262 = vsub.f32 %v1239, %v1261
        %v1263 = vsub.f32 %v1240, %v1261
        %v1264 = vsub.f32 %v1241, %v1261
        %v1265 = vsub.f32 %v1242, %v1261
        %v1266 = vsub.f32 %v1243, %v1261
        %v1267 = vsub.f32 %v1244, %v1261
        %v1268 = vstv %s1112
        %v1269 = vmul.f32 %v1268, %v1262
        %v1270 = vmul.f32 %v1268, %v1263
        %v1271 = vmul.f32 %v1268, %v1264
        %v1272 = vmul.f32 %v1268, %v1265
        %v1273 = vmul.f32 %v1268, %v1266
        %v1274 = vmul.f32 %v1268, %v1267
        %v1275 = vmul.f32 %v1269, 1.442695
        %v1276 = vpow.pop %v1275
        %v1277 = vmul.f32 %v1270, 1.442695
        %v1278 = vpow.pop %v1277
        %v1279 = vmul.f32 %v1271, 1.442695
        %v1280 = vpow.pop %v1279
        %v1281 = vmul.f32 %v1272, 1.442695
        %v1282 = vpow.pop %v1281
        %v1283 = vmul.f32 %v1273, 1.442695
        %v1284 = vpow.pop %v1283
        %v1285 = vmul.f32 %v1274, 1.442695
        %v1286 = vpow.pop %v1285
        %v1287 = vmul.f32 %v1276, %v1239
        %v1288 = vmul.f32 %v1278, %v1240
        %v1289 = vmul.f32 %v1280, %v1241
        %v1290 = vmul.f32 %v1282, %v1242
        %v1291 = vmul.f32 %v1284, %v1243
        %v1292 = vmul.f32 %v1286, %v1244
        %vm1293 = vcmask 392192
        %v1295 = vsel %vm1293, %v1049, 0
        %v1298 = vsel %vm1293, %v1050, 0
        %1300 = vmatprep.subr.mxu0 0.0
        %1301 = vmatpush1.msra.mxu0 0.0
        %1302 = vmatprep.subr.mxu0 0.0
        %1303 = vmatpush1.msra.mxu0 0.0
        %1304 = vmatprep.subr.mxu0 0.0
        %1305 = vmatpush1.msra.mxu0 0.0
        %1306 = vmatprep.subr.mxu0 0.0
        %1307 = vmatpush1.msra.mxu0 0.0
        %1308 = vmatprep.subr.mxu0 0.0
        %1309 = vmatpush1.msra.mxu0 0.0
        %1310 = vmatprep.subr.mxu0 0.0
        %1311 = vmatpush1.msra.mxu0 0.0
        %1312 = vmatprep.subr.mxu0 0.0
        %1313 = vmatpush1.msra.mxu0 0.0
        %1314 = vmatprep.subr.mxu0 0.0
        %1315 = vmatpush1.msra.mxu0 0.0
        %1316 = vmatprep.subr.mxu0 0.0
        %1317 = vmatpush1.msra.mxu0 0.0
        %1318 = vmatprep.subr.mxu0 0.0
        %1319 = vmatpush1.msra.mxu0 0.0
        %1320 = vmatprep.subr.mxu0 0.0
        %1321 = vmatpush1.msra.mxu0 %v1292
        %1322 = vmatprep.subr.mxu0 0.0
        %1323 = vmatpush1.msra.mxu0 %v1291
        %1324 = vmatprep.subr.mxu0 0.0
        %1325 = vmatpush1.msra.mxu0 %v1290
        %1326 = vmatprep.subr.mxu0 0.0
        %1327 = vmatpush1.msra.mxu0 %v1289
        %1328 = vmatprep.subr.mxu0 0.0
        %1329 = vmatpush1.msra.mxu0 %v1288
        %1330 = vmatprep.subr.mxu0 0.0
        %1331 = vmatpush1.msra.mxu0 %v1287
        %1332 = vmatprep.subr.mxu0 0.0
        %1333 = vmatpush2.msra.mxu0 0.0
        %1334 = vmatprep.subr.mxu0 0.0
        %1335 = vmatpush2.msra.mxu0 0.0
        %1336 = vmatprep.subr.mxu0 0.0
        %1337 = vmatpush2.msra.mxu0 0.0
        %1338 = vmatprep.subr.mxu0 0.0
        %1339 = vmatpush2.msra.mxu0 0.0
        %1340 = vmatprep.subr.mxu0 0.0
        %1341 = vmatpush2.msra.mxu0 0.0
        %1342 = vmatprep.subr.mxu0 0.0
        %1343 = vmatpush2.msra.mxu0 0.0
        %1344 = vmatprep.subr.mxu0 0.0
        %1345 = vmatpush2.msra.mxu0 0.0
        %1346 = vmatprep.subr.mxu0 0.0
        %1347 = vmatpush2.msra.mxu0 0.0
        %1348 = vmatprep.subr.mxu0 0.0
        %1349 = vmatpush2.msra.mxu0 0.0
        %1350 = vmatprep.subr.mxu0 0.0
        %1351 = vmatpush2.msra.mxu0 0.0
        %1352 = vmatprep.subr.mxu0 0.0
        %1353 = vmatpush2.msra.mxu0 0.0
        %1354 = vmatprep.subr.mxu0 0.0
        %1355 = vmatpush2.msra.mxu0 0.0
        %1356 = vmatprep.subr.mxu0 0.0
        %1357 = vmatpush2.msra.mxu0 0.0
        %1358 = vmatprep.subr.mxu0 0.0
        %1359 = vmatpush2.msra.mxu0 0.0
        %1360 = vmatprep.subr.mxu0 0.0
        %1361 = vmatpush2.msra.mxu0 0.0
        %1362 = vmatprep.subr.mxu0 0.0
        %1363 = vmatpush2.msra.mxu0 0.0
        %1364 = vmatprep.mubr.f32.mxu0 0.0
        %1365 = vmatmul.mubr.f32.gmra.mxu0 %v1295
        %v1366 = vpop.f32.mrf.mxu0
        %v1367 = vadd.f32 0.0, %v1366
        %v1368 = vpop.f32.mrf.mxu0
        %1369 = vmatprep.mubr.f32.mxu0 0.0
        %1370 = vmatmul.mubr.f32.gmra.mxu0 %v1298
        %v1371 = vpop.f32.mrf.mxu0
        %v1372 = vadd.f32 0.0, %v1371
        %v1373 = vpop.f32.mrf.mxu0
        %1374 = vdwg.mxu0
        %1375 = vmatprep.subr.mxu0 0.0
        %1376 = vmatpush1.msra.mxu0 0.0
        %1377 = vmatprep.subr.mxu0 0.0
        %1378 = vmatpush1.msra.mxu0 0.0
        %1379 = vmatprep.subr.mxu0 0.0
        %1380 = vmatpush1.msra.mxu0 0.0
        %1381 = vmatprep.subr.mxu0 0.0
        %1382 = vmatpush1.msra.mxu0 0.0
        %1383 = vmatprep.subr.mxu0 0.0
        %1384 = vmatpush1.msra.mxu0 0.0
        %1385 = vmatprep.subr.mxu0 0.0
        %1386 = vmatpush1.msra.mxu0 0.0
        %1387 = vmatprep.subr.mxu0 0.0
        %1388 = vmatpush1.msra.mxu0 0.0
        %1389 = vmatprep.subr.mxu0 0.0
        %1390 = vmatpush1.msra.mxu0 0.0
        %1391 = vmatprep.subr.mxu0 0.0
        %1392 = vmatpush1.msra.mxu0 0.0
        %1393 = vmatprep.subr.mxu0 0.0
        %1394 = vmatpush1.msra.mxu0 0.0
        %1395 = vmatprep.subr.mxu0 0.0
        %1396 = vmatpush1.msra.mxu0 %v1286
        %1397 = vmatprep.subr.mxu0 0.0
        %1398 = vmatpush1.msra.mxu0 %v1284
        %1399 = vmatprep.subr.mxu0 0.0
        %1400 = vmatpush1.msra.mxu0 %v1282
        %1401 = vmatprep.subr.mxu0 0.0
        %1402 = vmatpush1.msra.mxu0 %v1280
        %1403 = vmatprep.subr.mxu0 0.0
        %1404 = vmatpush1.msra.mxu0 %v1278
        %1405 = vmatprep.subr.mxu0 0.0
        %1406 = vmatpush1.msra.mxu0 %v1276
        %1407 = vmatprep.subr.mxu0 0.0
        %1408 = vmatpush2.msra.mxu0 0.0
        %1409 = vmatprep.subr.mxu0 0.0
        %1410 = vmatpush2.msra.mxu0 0.0
        %1411 = vmatprep.subr.mxu0 0.0
        %1412 = vmatpush2.msra.mxu0 0.0
        %1413 = vmatprep.subr.mxu0 0.0
        %1414 = vmatpush2.msra.mxu0 0.0
        %1415 = vmatprep.subr.mxu0 0.0
        %1416 = vmatpush2.msra.mxu0 0.0
        %1417 = vmatprep.subr.mxu0 0.0
        %1418 = vmatpush2.msra.mxu0 0.0
        %1419 = vmatprep.subr.mxu0 0.0
        %1420 = vmatpush2.msra.mxu0 0.0
        %1421 = vmatprep.subr.mxu0 0.0
        %1422 = vmatpush2.msra.mxu0 0.0
        %1423 = vmatprep.subr.mxu0 0.0
        %1424 = vmatpush2.msra.mxu0 0.0
        %1425 = vmatprep.subr.mxu0 0.0
        %1426 = vmatpush2.msra.mxu0 0.0
        %1427 = vmatprep.subr.mxu0 0.0
        %1428 = vmatpush2.msra.mxu0 0.0
        %1429 = vmatprep.subr.mxu0 0.0
        %1430 = vmatpush2.msra.mxu0 0.0
        %1431 = vmatprep.subr.mxu0 0.0
        %1432 = vmatpush2.msra.mxu0 0.0
        %1433 = vmatprep.subr.mxu0 0.0
        %1434 = vmatpush2.msra.mxu0 0.0
        %1435 = vmatprep.subr.mxu0 0.0
        %1436 = vmatpush2.msra.mxu0 0.0
        %1437 = vmatprep.subr.mxu0 0.0
        %1438 = vmatpush2.msra.mxu0 0.0
        %1439 = vmatprep.mubr.f32.mxu0 0.0
        %1440 = vmatmul.mubr.f32.gmra.mxu0 %v1295
        %v1441 = vpop.f32.mrf.mxu0
        %v1442 = vadd.f32 1e-16, %v1441
        %v1443 = vpop.f32.mrf.mxu0
        %1444 = vmatprep.mubr.f32.mxu0 0.0
        %1445 = vmatmul.mubr.f32.gmra.mxu0 %v1298
        %v1446 = vpop.f32.mrf.mxu0
        %v1447 = vadd.f32 1e-16, %v1446
        %v1448 = vpop.f32.mrf.mxu0
        %1449 = vdwg.mxu0
        %v1450 = vrcp.pop %v1442
        %v1451 = vmul.f32 1.0, %v1450
        %v1452 = vrcp.pop %v1447
        %v1453 = vmul.f32 1.0, %v1452
        %v1454 = vmul.f32 %v1367, %v1451
        %v1455 = vmul.f32 %v1372, %v1453
        %v1456 = vadd.f32 %v1454, %v1110
        %v1457 = vadd.f32 %v1455, %v1111
        %v1458 = vld [vmem:[%s743] sm:$0xff]
        %v1459 = vld [vmem:[%s743 + $0x8] sm:$0xff]
        %v1460 = vld [vmem:[%s743 + $0x10] sm:$0xff]
        %v1461 = vld [vmem:[%s743 + $0x18] sm:$0xff]
        %v1462 = vld [vmem:[%s746] sm:$0x1]
        %v1464 = vlaneseq
        %v1465 = vshrl.u32 %v1464, 7
        %v1466 = vsub.s32 0, %v1465
        %v1467 = vrot.slane %v1462, %v1466
        %v1470 = vsel %vm1055, %v1456, 0
        %v1473 = vsel %vm1055, %v1457, 0
        %1475 = vmatprep.subr.mxu0 0.0
        %1476 = vmatpush1.msra.mxu0 0.0
        %1477 = vmatprep.subr.mxu0 0.0
        %1478 = vmatpush1.msra.mxu0 0.0
        %1479 = vmatprep.subr.mxu0 0.0
        %1480 = vmatpush1.msra.mxu0 0.0
        %1481 = vmatprep.subr.mxu0 0.0
        %1482 = vmatpush1.msra.mxu0 0.0
        %1483 = vmatprep.subr.mxu0 0.0
        %1484 = vmatpush1.msra.mxu0 0.0
        %1485 = vmatprep.subr.mxu0 0.0
        %1486 = vmatpush1.msra.mxu0 0.0
        %1487 = vmatprep.subr.mxu0 0.0
        %1488 = vmatpush1.msra.mxu0 0.0
        %1489 = vmatprep.subr.mxu0 0.0
        %1490 = vmatpush1.msra.mxu0 0.0
        %1491 = vmatprep.subr.mxu0 0.0
        %1492 = vmatpush1.msra.mxu0 0.0
        %1493 = vmatprep.subr.mxu0 0.0
        %1494 = vmatpush1.msra.mxu0 0.0
        %1495 = vmatprep.subr.mxu0 0.0
        %1496 = vmatpush1.msra.mxu0 0.0
        %1497 = vmatprep.subr.mxu0 0.0
        %1498 = vmatpush1.msra.mxu0 0.0
        %1499 = vmatprep.subr.mxu0 0.0
        %1500 = vmatpush1.msra.mxu0 %v1461
        %1501 = vmatprep.subr.mxu0 0.0
        %1502 = vmatpush1.msra.mxu0 %v1460
        %1503 = vmatprep.subr.mxu0 0.0
        %1504 = vmatpush1.msra.mxu0 %v1459
        %1505 = vmatprep.subr.mxu0 0.0
        %1506 = vmatpush1.msra.mxu0 %v1458
        %1507 = vmatprep.subr.mxu0 0.0
        %1508 = vmatpush2.msra.mxu0 0.0
        %1509 = vmatprep.subr.mxu0 0.0
        %1510 = vmatpush2.msra.mxu0 0.0
        %1511 = vmatprep.subr.mxu0 0.0
        %1512 = vmatpush2.msra.mxu0 0.0
        %1513 = vmatprep.subr.mxu0 0.0
        %1514 = vmatpush2.msra.mxu0 0.0
        %1515 = vmatprep.subr.mxu0 0.0
        %1516 = vmatpush2.msra.mxu0 0.0
        %1517 = vmatprep.subr.mxu0 0.0
        %1518 = vmatpush2.msra.mxu0 0.0
        %1519 = vmatprep.subr.mxu0 0.0
        %1520 = vmatpush2.msra.mxu0 0.0
        %1521 = vmatprep.subr.mxu0 0.0
        %1522 = vmatpush2.msra.mxu0 0.0
        %1523 = vmatprep.subr.mxu0 0.0
        %1524 = vmatpush2.msra.mxu0 0.0
        %1525 = vmatprep.subr.mxu0 0.0
        %1526 = vmatpush2.msra.mxu0 0.0
        %1527 = vmatprep.subr.mxu0 0.0
        %1528 = vmatpush2.msra.mxu0 0.0
        %1529 = vmatprep.subr.mxu0 0.0
        %1530 = vmatpush2.msra.mxu0 0.0
        %1531 = vmatprep.subr.mxu0 0.0
        %1532 = vmatpush2.msra.mxu0 0.0
        %1533 = vmatprep.subr.mxu0 0.0
        %1534 = vmatpush2.msra.mxu0 0.0
        %1535 = vmatprep.subr.mxu0 0.0
        %1536 = vmatpush2.msra.mxu0 0.0
        %1537 = vmatprep.subr.mxu0 0.0
        %1538 = vmatpush2.msra.mxu0 0.0
        %1539 = vmatprep.mubr.f32.mxu0 0.0
        %1540 = vmatmul.mubr.f32.gmra.mxu0 %v1470
        %v1541 = vpop.f32.mrf.mxu0
        %v1542 = vadd.f32 %v1467, %v1541
        %v1543 = vpop.f32.mrf.mxu0
        %1544 = vmatprep.mubr.f32.mxu0 0.0
        %1545 = vmatmul.mubr.f32.gmra.mxu0 %v1473
        %v1546 = vpop.f32.mrf.mxu0
        %v1547 = vadd.f32 %v1467, %v1546
        %v1548 = vpop.f32.mrf.mxu0
        %1549 = vdwg.mxu0
        %v1550 = vld [vmem:[%s749] sm:$0x1]
        %v1551 = vld [vmem:[%s752] sm:$0x1]
        %vm1552 = vcmask 523264
        %v1553 = vsel %vm1552, %v1542, 0.0
        %1554 = vadd.xlane.f32.xlu0 %v1553
        %v1555 = vpop.xlane.xlu0 %1554
        %v1556 = vsel %vm1552, %v1547, 0.0
        %1557 = vadd.xlane.f32.xlu0 %v1556
        %v1558 = vpop.xlane.xlu0 %1557
        %v1559 = vrcp.pop 64.0
        %v1560 = vmul.f32 %v1555, %v1559
        %v1561 = vmul.f32 %v1558, %v1559
        %v1562 = vsub.f32 %v1542, %v1560
        %v1563 = vsub.f32 %v1547, %v1561
        %v1564 = vmul.f32 %v1562, %v1562
        %v1565 = vmul.f32 %v1563, %v1563
        %v1566 = vsel %vm1552, %v1564, 0.0
        %1567 = vadd.xlane.f32.xlu0 %v1566
        %v1568 = vpop.xlane.xlu0 %1567
        %v1569 = vsel %vm1552, %v1565, 0.0
        %1570 = vadd.xlane.f32.xlu0 %v1569
        %v1571 = vpop.xlane.xlu0 %1570
        %v1572 = vmul.f32 %v1568, %v1559
        %v1573 = vmul.f32 %v1571, %v1559
        %v1574 = vadd.f32 %v1572, 1e-05
        %v1575 = vadd.f32 %v1573, 1e-05
        %v1576 = vrsqrt.pop %v1574
        %v1577 = vrsqrt.pop %v1575
        %v1578 = vmul.f32 %v1562, %v1576
        %v1579 = vmul.f32 %v1563, %v1577
        %v1581 = vlaneseq
        %v1582 = vshrl.u32 %v1581, 7
        %v1583 = vsub.s32 0, %v1582
        %v1584 = vrot.slane %v1550, %v1583
        %v1586 = vmul.f32 %v1578, %v1584
        %v1587 = vmul.f32 %v1579, %v1584
        %v1589 = vlaneseq
        %v1590 = vshrl.u32 %v1589, 7
        %v1591 = vsub.s32 0, %v1590
        %v1592 = vrot.slane %v1551, %v1591
        %v1594 = vadd.f32 %v1586, %v1592
        %v1595 = vadd.f32 %v1587, %v1592
        %v1596 = vmax.f32 %v1594, 0.0
        %v1597 = vmax.f32 %v1595, 0.0
        %v1598 = vld [vmem:[%s757] sm:$0xff]
        %v1599 = vld [vmem:[%s757 + $0x8] sm:$0xff]
        %v1600 = vld [vmem:[%s757 + $0x10] sm:$0xff]
        %v1601 = vld [vmem:[%s757 + $0x18] sm:$0xff]
        %v1602 = vld [vmem:[%s757 + $0x20] sm:$0xff]
        %v1603 = vld [vmem:[%s757 + $0x28] sm:$0xff]
        %v1604 = vld [vmem:[%s757 + $0x30] sm:$0xff]
        %v1605 = vld [vmem:[%s757 + $0x38] sm:$0xff]
        %v1606 = vld [vmem:[%s760] sm:$0x1]
        %v1608 = vlaneseq
        %v1609 = vshrl.u32 %v1608, 7
        %v1610 = vsub.s32 0, %v1609
        %v1611 = vrot.slane %v1606, %v1610
        %v1614 = vsel %vm1552, %v1596, 0
        %v1617 = vsel %vm1552, %v1597, 0
        %1619 = vmatprep.subr.mxu0 0.0
        %1620 = vmatpush1.msra.mxu0 0.0
        %1621 = vmatprep.subr.mxu0 0.0
        %1622 = vmatpush1.msra.mxu0 0.0
        %1623 = vmatprep.subr.mxu0 0.0
        %1624 = vmatpush1.msra.mxu0 0.0
        %1625 = vmatprep.subr.mxu0 0.0
        %1626 = vmatpush1.msra.mxu0 0.0
        %1627 = vmatprep.subr.mxu0 0.0
        %1628 = vmatpush1.msra.mxu0 0.0
        %1629 = vmatprep.subr.mxu0 0.0
        %1630 = vmatpush1.msra.mxu0 0.0
        %1631 = vmatprep.subr.mxu0 0.0
        %1632 = vmatpush1.msra.mxu0 0.0
        %1633 = vmatprep.subr.mxu0 0.0
        %1634 = vmatpush1.msra.mxu0 0.0
        %1635 = vmatprep.subr.mxu0 0.0
        %1636 = vmatpush1.msra.mxu0 %v1605
        %1637 = vmatprep.subr.mxu0 0.0
        %1638 = vmatpush1.msra.mxu0 %v1604
        %1639 = vmatprep.subr.mxu0 0.0
        %1640 = vmatpush1.msra.mxu0 %v1603
        %1641 = vmatprep.subr.mxu0 0.0
        %1642 = vmatpush1.msra.mxu0 %v1602
        %1643 = vmatprep.subr.mxu0 0.0
        %1644 = vmatpush1.msra.mxu0 %v1601
        %1645 = vmatprep.subr.mxu0 0.0
        %1646 = vmatpush1.msra.mxu0 %v1600
        %1647 = vmatprep.subr.mxu0 0.0
        %1648 = vmatpush1.msra.mxu0 %v1599
        %1649 = vmatprep.subr.mxu0 0.0
        %1650 = vmatpush1.msra.mxu0 %v1598
        %1651 = vmatprep.subr.mxu0 0.0
        %1652 = vmatpush2.msra.mxu0 0.0
        %1653 = vmatprep.subr.mxu0 0.0
        %1654 = vmatpush2.msra.mxu0 0.0
        %1655 = vmatprep.subr.mxu0 0.0
        %1656 = vmatpush2.msra.mxu0 0.0
        %1657 = vmatprep.subr.mxu0 0.0
        %1658 = vmatpush2.msra.mxu0 0.0
        %1659 = vmatprep.subr.mxu0 0.0
        %1660 = vmatpush2.msra.mxu0 0.0
        %1661 = vmatprep.subr.mxu0 0.0
        %1662 = vmatpush2.msra.mxu0 0.0
        %1663 = vmatprep.subr.mxu0 0.0
        %1664 = vmatpush2.msra.mxu0 0.0
        %1665 = vmatprep.subr.mxu0 0.0
        %1666 = vmatpush2.msra.mxu0 0.0
        %1667 = vmatprep.subr.mxu0 0.0
        %1668 = vmatpush2.msra.mxu0 0.0
        %1669 = vmatprep.subr.mxu0 0.0
        %1670 = vmatpush2.msra.mxu0 0.0
        %1671 = vmatprep.subr.mxu0 0.0
        %1672 = vmatpush2.msra.mxu0 0.0
        %1673 = vmatprep.subr.mxu0 0.0
        %1674 = vmatpush2.msra.mxu0 0.0
        %1675 = vmatprep.subr.mxu0 0.0
        %1676 = vmatpush2.msra.mxu0 0.0
        %1677 = vmatprep.subr.mxu0 0.0
        %1678 = vmatpush2.msra.mxu0 0.0
        %1679 = vmatprep.subr.mxu0 0.0
        %1680 = vmatpush2.msra.mxu0 0.0
        %1681 = vmatprep.subr.mxu0 0.0
        %1682 = vmatpush2.msra.mxu0 0.0
        %1683 = vmatprep.mubr.f32.mxu0 0.0
        %1684 = vmatmul.mubr.f32.gmra.mxu0 %v1614
        %v1685 = vpop.f32.mrf.mxu0
        %v1686 = vadd.f32 %v1611, %v1685
        %v1687 = vpop.f32.mrf.mxu0
        %1688 = vmatprep.mubr.f32.mxu0 0.0
        %1689 = vmatmul.mubr.f32.gmra.mxu0 %v1617
        %v1690 = vpop.f32.mrf.mxu0
        %v1691 = vadd.f32 %v1611, %v1690
        %v1692 = vpop.f32.mrf.mxu0
        %1693 = vdwg.mxu0
        %v1694 = vmul.f32 %v1107, %v1051
        %v1695 = vmul.f32 %v1107, %v1052
        %v1696 = vadd.f32 %v1686, %v1694
        %v1697 = vadd.f32 %v1691, %v1695
        %1698 = vst.msk [vmem:[#allocation2] sm:$0xff] %vm1055, %v1696
        %1699 = vst.msk [vmem:[#allocation2 + $0x8] sm:$0xff] %vm1055, %v1697
        %p1700 = scmp.eq.s32.totalorder %s34, 2
        // Predicated region
        $region113: #{gen_forward.1} parent=103 // pred_check
          %p1701 = pneg %p1700
        $region114: #{gen_forward.1} parent=103 // pred_check_branch
          %1703 = sbr.rel (%p1701) target = $region116
        $region115: #{gen_forward.1} parent=103 // pred_region
          %v1704 = vld [vmem:[%s17] sm:$0x1]
          %v1705 = vld [vmem:[%s18] sm:$0x1]
          %v1706 = vsel %vm1055, %v1696, 0.0
          %1707 = vadd.xlane.f32.xlu0 %v1706
          %v1708 = vpop.xlane.xlu0 %1707
          %v1709 = vsel %vm1055, %v1697, 0.0
          %1710 = vadd.xlane.f32.xlu0 %v1709
          %v1711 = vpop.xlane.xlu0 %1710
          %v1712 = vmul.f32 %v1708, %v1062
          %v1713 = vmul.f32 %v1711, %v1062
          %v1714 = vsub.f32 %v1696, %v1712
          %v1715 = vsub.f32 %v1697, %v1713
          %v1716 = vmul.f32 %v1714, %v1714
          %v1717 = vmul.f32 %v1715, %v1715
          %v1718 = vsel %vm1055, %v1716, 0.0
          %1719 = vadd.xlane.f32.xlu0 %v1718
          %v1720 = vpop.xlane.xlu0 %1719
          %v1721 = vsel %vm1055, %v1717, 0.0
          %1722 = vadd.xlane.f32.xlu0 %v1721
          %v1723 = vpop.xlane.xlu0 %1722
          %v1724 = vmul.f32 %v1720, %v1062
          %v1725 = vmul.f32 %v1723, %v1062
          %v1726 = vadd.f32 %v1724, 1e-05
          %v1727 = vadd.f32 %v1725, 1e-05
          %v1728 = vrsqrt.pop %v1726
          %v1729 = vrsqrt.pop %v1727
          %v1730 = vmul.f32 %v1714, %v1728
          %v1731 = vmul.f32 %v1715, %v1729
          %v1733 = vlaneseq
          %v1734 = vshrl.u32 %v1733, 7
          %v1735 = vsub.s32 0, %v1734
          %v1736 = vrot.slane %v1704, %v1735
          %v1738 = vmul.f32 %v1730, %v1736
          %v1739 = vmul.f32 %v1731, %v1736
          %v1741 = vlaneseq
          %v1742 = vshrl.u32 %v1741, 7
          %v1743 = vsub.s32 0, %v1742
          %v1744 = vrot.slane %v1705, %v1743
          %v1746 = vadd.f32 %v1738, %v1744
          %v1747 = vadd.f32 %v1739, %v1744
          %v1748 = vmax.f32 %v1746, 0.0
          %v1749 = vmax.f32 %v1747, 0.0
          %v1750 = vld [vmem:[%s19] sm:$0xff]
          %v1751 = vld [vmem:[%s19 + $0x8] sm:$0xff]
          %v1752 = vld [vmem:[%s19 + $0x10] sm:$0xff]
          %v1753 = vld [vmem:[%s19 + $0x18] sm:$0xff]
          %v1754 = vld [vmem:[%s20] sm:$0x1]
          %v1756 = vlaneseq
          %v1757 = vshrl.u32 %v1756, 7
          %v1758 = vsub.s32 0, %v1757
          %v1759 = vrot.slane %v1754, %v1758
          %v1762 = vsel %vm1055, %v1748, 0
          %v1765 = vsel %vm1055, %v1749, 0
          %1767 = vmatprep.subr.mxu0 0.0
          %1768 = vmatpush1.msra.mxu0 0.0
          %1769 = vmatprep.subr.mxu0 0.0
          %1770 = vmatpush1.msra.mxu0 0.0
          %1771 = vmatprep.subr.mxu0 0.0
          %1772 = vmatpush1.msra.mxu0 0.0
          %1773 = vmatprep.subr.mxu0 0.0
          %1774 = vmatpush1.msra.mxu0 0.0
          %1775 = vmatprep.subr.mxu0 0.0
          %1776 = vmatpush1.msra.mxu0 0.0
          %1777 = vmatprep.subr.mxu0 0.0
          %1778 = vmatpush1.msra.mxu0 0.0
          %1779 = vmatprep.subr.mxu0 0.0
          %1780 = vmatpush1.msra.mxu0 0.0
          %1781 = vmatprep.subr.mxu0 0.0
          %1782 = vmatpush1.msra.mxu0 0.0
          %1783 = vmatprep.subr.mxu0 0.0
          %1784 = vmatpush1.msra.mxu0 0.0
          %1785 = vmatprep.subr.mxu0 0.0
          %1786 = vmatpush1.msra.mxu0 0.0
          %1787 = vmatprep.subr.mxu0 0.0
          %1788 = vmatpush1.msra.mxu0 0.0
          %1789 = vmatprep.subr.mxu0 0.0
          %1790 = vmatpush1.msra.mxu0 0.0
          %1791 = vmatprep.subr.mxu0 0.0
          %1792 = vmatpush1.msra.mxu0 %v1753
          %1793 = vmatprep.subr.mxu0 0.0
          %1794 = vmatpush1.msra.mxu0 %v1752
          %1795 = vmatprep.subr.mxu0 0.0
          %1796 = vmatpush1.msra.mxu0 %v1751
          %1797 = vmatprep.subr.mxu0 0.0
          %1798 = vmatpush1.msra.mxu0 %v1750
          %1799 = vmatprep.subr.mxu0 0.0
          %1800 = vmatpush2.msra.mxu0 0.0
          %1801 = vmatprep.subr.mxu0 0.0
          %1802 = vmatpush2.msra.mxu0 0.0
          %1803 = vmatprep.subr.mxu0 0.0
          %1804 = vmatpush2.msra.mxu0 0.0
          %1805 = vmatprep.subr.mxu0 0.0
          %1806 = vmatpush2.msra.mxu0 0.0
          %1807 = vmatprep.subr.mxu0 0.0
          %1808 = vmatpush2.msra.mxu0 0.0
          %1809 = vmatprep.subr.mxu0 0.0
          %1810 = vmatpush2.msra.mxu0 0.0
          %1811 = vmatprep.subr.mxu0 0.0
          %1812 = vmatpush2.msra.mxu0 0.0
          %1813 = vmatprep.subr.mxu0 0.0
          %1814 = vmatpush2.msra.mxu0 0.0
          %1815 = vmatprep.subr.mxu0 0.0
          %1816 = vmatpush2.msra.mxu0 0.0
          %1817 = vmatprep.subr.mxu0 0.0
          %1818 = vmatpush2.msra.mxu0 0.0
          %1819 = vmatprep.subr.mxu0 0.0
          %1820 = vmatpush2.msra.mxu0 0.0
          %1821 = vmatprep.subr.mxu0 0.0
          %1822 = vmatpush2.msra.mxu0 0.0
          %1823 = vmatprep.subr.mxu0 0.0
          %1824 = vmatpush2.msra.mxu0 0.0
          %1825 = vmatprep.subr.mxu0 0.0
          %1826 = vmatpush2.msra.mxu0 0.0
          %1827 = vmatprep.subr.mxu0 0.0
          %1828 = vmatpush2.msra.mxu0 0.0
          %1829 = vmatprep.subr.mxu0 0.0
          %1830 = vmatpush2.msra.mxu0 0.0
          %1831 = vmatprep.mubr.f32.mxu0 0.0
          %1832 = vmatmul.mubr.f32.gmra.mxu0 %v1762
          %v1833 = vpop.f32.mrf.mxu0
          %v1834 = vadd.f32 %v1759, %v1833
          %v1835 = vpop.f32.mrf.mxu0
          %1836 = vmatprep.mubr.f32.mxu0 0.0
          %1837 = vmatmul.mubr.f32.gmra.mxu0 %v1765
          %v1838 = vpop.f32.mrf.mxu0
          %v1839 = vadd.f32 %v1759, %v1838
          %v1840 = vpop.f32.mrf.mxu0
          %1841 = vdwg.mxu0
          %1842 = vst [vmem:[#allocation7] sm:$0xff] %v1834
          %1843 = vst [vmem:[#allocation7 + $0x8] sm:$0xff] %v1839
        $region116: #{gen_forward.1} parent=103 // pred_fallthru
          _
        // Predicated region
        $region117: #{gen_forward.1} parent=103 // pred_check
          %p1844 = pneg %p528
        $region118: #{gen_forward.1} parent=103 // pred_check_branch
          %1846 = sbr.rel (%p1844) target = $region120
        $region119: #{gen_forward.1} parent=103 // pred_region
          %s1848 = ssub.s32 256, 256
          %1849 = vsyncadd [#allocation5], %s1848
          %s1850 = sshll.u32 [#allocation7], 4
          %s1851 = int_to_ptr.vmem [resolvable:$true] %s1850
          %1856 = dma.vmem_to_hbm [thread:$0]  %s1851, 256, %s21, [#allocation5], 128, 128, 8
        $region120: #{gen_forward.1} parent=103 // pred_fallthru
          _
        // Predicated region
        $region121: #{gen_forward.1} parent=103 // pred_check
          %p1857 = pneg %p528
        $region122: #{gen_forward.1} parent=103 // pred_check_branch
          %1859 = sbr.rel (%p1857) target = $region124
        $region123: #{gen_forward.1} parent=103 // pred_region
          %1860 = dma.done [#allocation5], 256
        $region124: #{gen_forward.1} parent=103 // pred_fallthru
          _
      $region104: #{gen_forward.1} parent=5 // pred_fallthru
        _
      %p1861 = scmp.le.s32.totalorder 2, %s29
      // Predicated region
      $region125: #{gen_forward.1} parent=5 // pred_check
        %p1862 = pneg %p1861
      $region126: #{gen_forward.1} parent=5 // pred_check_branch
        %1864 = sbr.rel (%p1862) target = $region128
      $region127: #{gen_forward.1} parent=5 // pred_region
        %s1865 = ssub.s32 %s29, 2
      $region128: #{gen_forward.1} parent=5 // pred_fallthru
        _
    $region6: #{gen_forward.1} parent=1 // loop_footer
      %s33 = sadd.s32 1, %s29
    $region7: #{gen_forward.1} parent=1 // loop_footer_branch
      %28 = sbr.rel target = $region3
    $region8: #{gen_forward.1} parent=1 // loop_exit
      _
    %1866 = vsyncpa [#allocation5], 1
    %s1867 = scalar_lea.sflag [#allocation5], 1
    %1868 = vsyncpa %s1867, 1
    %1869 = vsyncpa [#allocation6], 1
    %s1870 = scalar_lea.sflag [#allocation6], 1
    %1871 = vsyncpa %s1870, 1

</llo_original>
